<compile_context>
chip_gen: v6e
topology: v6e:2x2x1
jax: 0.10.0
libtpu: 0.0.40
codegen_flags: <defaults>
</compile_context>

<pallas_src>
import functools

import numpy as np
import jax
import jax.numpy as jnp
from jax.experimental import pallas as pl
from jax.experimental.pallas import tpu as pltpu


# ----------------------------------------------------------------------------
# Mask generation (faithful reimplementation of the PyTorch helpers, numpy)
# ----------------------------------------------------------------------------
def generate_mask_matrix(shape, connection=1.0):
    np.random.seed(0)
    s = np.random.uniform(size=shape)
    s_flat = s.flatten()
    s_flat.sort()
    threshold = s_flat[int(shape[0] * shape[1] * (1 - connection))]
    super_threshold_indices = s >= threshold
    lower_threshold_indices = s < threshold
    s[super_threshold_indices] = 1.0
    s[lower_threshold_indices] = 0.0
    return s


def generate_weight_mask(shape, connection=1.0):
    return [generate_mask_matrix((shape[0], shape[1]), connection=connection)]


# ----------------------------------------------------------------------------
# Pallas kernel: whole RCLSTM recurrence in one kernel invocation
# ----------------------------------------------------------------------------
def _make_rclstm_kernel(num_layers, T, B, H):
    def kernel(xflat_ref, wx_ref, bg_ref, wh_ref, h_out_ref, xproj_scr):
        # ---- Phase 0: loop-invariant input projection -----------------------
        # One batched MXU matmul (T*B, I) @ (I, H), bias broadcast added once.
        xproj_scr[...] = (
            jnp.dot(xflat_ref[...], wx_ref[...],
                    preferred_element_type=jnp.float32)
            + bg_ref[...]
        )

        wh = wh_ref[...]                     # (H, H), resident in vregs

        # ---- Phase 1: serial recurrence (fully unrolled, 16 tiny steps) -----
        h = jnp.zeros((B, H), jnp.float32)
        c = jnp.zeros((B, H), jnp.float32)
        for _layer in range(num_layers):     # static — the input projection is
            for t in range(T):               # identical across layers
                xp = xproj_scr[pl.ds(t * B, B), :]            # (B, H), static slice
                g = jnp.dot(h, wh, preferred_element_type=jnp.float32) + xp
                s = jax.nn.sigmoid(g)        # f == i == o (shared gate weights)
                c = (c + jnp.tanh(g)) * s    # == c*f + tanh(g)*i  with f == i
                h = jnp.tanh(c) * s
        h_out_ref[...] = h

    return kernel


@functools.partial(jax.jit, static_argnames=("num_layers",))
def embed_rclstm_forward(x, gate_w, gate_b, out_w, out_b, *, num_layers):
    """x: (T, B, I) float32.  gate_w: (H, H+I)  (PyTorch nn.Linear layout).
    Returns (B, I) — output of the last time step of the last layer."""
    T, B, I = x.shape
    H = gate_w.shape[0]

    # combined = cat([hidden, input], dim=1): first H columns of gate_w hit
    # hidden, last I columns hit the input slice.  Pre-transpose for h @ W.
    wh = gate_w[:, :H].T.astype(jnp.float32)          # (H, H)
    wx = gate_w[:, H:].T.astype(jnp.float32)          # (I, H)
    bg = gate_b.astype(jnp.float32).reshape(1, H)     # (1, H)
    x_flat = x.astype(jnp.float32).reshape(T * B, I)  # (T*B, I)

    kernel = _make_rclstm_kernel(num_layers, T, B, H)

    h_final = pl.pallas_call(
        kernel,
        out_shape=jax.ShapeDtypeStruct((B, H), jnp.float32),
        grid=(1,),                                     # single invocation
        in_specs=[
            pl.BlockSpec((T * B, I), lambda i: (0, 0)),   # x (flattened over T,B)
            pl.BlockSpec((I, H), lambda i: (0, 0)),       # Wx
            pl.BlockSpec((1, H), lambda i: (0, 0)),       # b_gate
            pl.BlockSpec((H, H), lambda i: (0, 0)),       # Wh
        ],
        out_specs=pl.BlockSpec((B, H), lambda i: (0, 0)),
        scratch_shapes=[
            pltpu.VMEM((T * B, H), jnp.float32),          # X_proj buffer
        ],
        compiler_params=pltpu.CompilerParams(
            dimension_semantics=("arbitrary",),
        ),
    )(x_flat, wx, bg, wh)

    # Tiny final projection handled by XLA (removes conditional tail and the
    # lane-sparse masked store from the kernel).
    return h_final @ out_w.T.astype(jnp.float32) + out_b.astype(jnp.float32)


# ----------------------------------------------------------------------------
# Pure-JAX reference (mirrors the PyTorch forward exactly)
# ----------------------------------------------------------------------------
def embed_rclstm_reference(x, gate_w, gate_b, out_w, out_b, num_layers):
    T, B, I = x.shape
    H = gate_w.shape[0]
    hidden = jnp.zeros((B, H), jnp.float32)
    cell = jnp.zeros((B, H), jnp.float32)
    output = None
    for _layer in range(num_layers):
        for t in range(T):
            x_t = x[t]
            combined = jnp.concatenate([hidden, x_t], axis=1)   # (B, H+I)
            g = combined @ gate_w.T + gate_b
            f = jax.nn.sigmoid(g)
            i = jax.nn.sigmoid(g)
            o = jax.nn.sigmoid(g)
            ch = jnp.tanh(g)
            cell = cell * f + ch * i
            hidden = jnp.tanh(cell) * o
            output = hidden @ out_w.T + out_b
    return output


# ----------------------------------------------------------------------------
# Deterministic parameter construction (synthetic; no checkpoint loading)
# ----------------------------------------------------------------------------
def init_params(key, input_size, hidden_size, connectivity):
    k1, k2, k3, k4 = jax.random.split(key, 4)
    H, I = hidden_size, input_size

    # gate.weight: orthogonal init then sparsified by the connectivity mask
    gate_w = jax.nn.initializers.orthogonal()(k1, (H, H + I), jnp.float32)
    mask = jnp.asarray(generate_weight_mask((H, H + I), connectivity)[0],
                       jnp.float32)
    gate_w = gate_w * mask

    bound_g = 1.0 / np.sqrt(H + I)
    gate_b = jax.random.uniform(k2, (H,), jnp.float32, -bound_g, bound_g)

    bound_o = 1.0 / np.sqrt(H)
    out_w = jax.random.uniform(k3, (I, H), jnp.float32, -bound_o, bound_o)
    out_b = jax.random.uniform(k4, (I,), jnp.float32, -bound_o, bound_o)
    return gate_w, gate_b, out_w, out_b


if __name__ == "__main__":
    # small shapes consistent with the module: seq=8, batch=8, input=16, hidden=32
    T, B, I, H = 8, 8, 16, 32
    num_layers = 2
    connectivity = 0.5

    key = jax.random.PRNGKey(0)
    kx, kp = jax.random.split(key)
    x = jax.random.normal(kx, (T, B, I), jnp.float32)   # (max_time, batch, input)

    gate_w, gate_b, out_w, out_b = init_params(kp, I, H, connectivity)

    out = embed_rclstm_forward(x, gate_w, gate_b, out_w, out_b,
                               num_layers=num_layers)
    out = jax.block_until_ready(out)

    ref = embed_rclstm_reference(x, gate_w, gate_b, out_w, out_b, num_layers)
    np.testing.assert_allclose(np.asarray(out), np.asarray(ref),
                               rtol=1e-5, atol=1e-5)

    print("KERNEL_OK")
</pallas_src>

<mosaic_0001>
module attributes {stable_mosaic.version = 11 : i64} {
  func.func @kernel(%arg0: i32, %arg1: memref<64x16xf32, #tpu.memory_space<vmem>>, %arg2: memref<16x32xf32, #tpu.memory_space<vmem>>, %arg3: memref<1x32xf32, #tpu.memory_space<vmem>>, %arg4: memref<32x32xf32, #tpu.memory_space<vmem>>, %arg5: memref<8x32xf32, #tpu.memory_space<vmem>>, %arg6: memref<64x32xf32, #tpu.memory_space<vmem>>) attributes {dimension_semantics = [#tpu.dimension_semantics<arbitrary>], iteration_bounds = array<i64: 1>, scalar_prefetch = 0 : i64, scratch_operands = 1 : i64, tpu.core_type = #tpu.core_type<tc>, window_params = [{pipeline_mode = #tpu.pipeline_mode<synchronous>, transform_indices = @transform_0, window_bounds = array<i64: 64, 16>}, {pipeline_mode = #tpu.pipeline_mode<synchronous>, transform_indices = @transform_1, window_bounds = array<i64: 16, 32>}, {pipeline_mode = #tpu.pipeline_mode<synchronous>, transform_indices = @transform_2, window_bounds = array<i64: 1, 32>}, {pipeline_mode = #tpu.pipeline_mode<synchronous>, transform_indices = @transform_3, window_bounds = array<i64: 32, 32>}, {pipeline_mode = #tpu.pipeline_mode<synchronous>, transform_indices = @transform_4, window_bounds = array<i64: 8, 32>}]} {
    %c0 = arith.constant 0 : index
    %c0_0 = arith.constant 0 : index
    %0 = vector.load %arg1[%c0, %c0_0] : memref<64x16xf32, #tpu.memory_space<vmem>>, vector<64x16xf32>
    %c0_1 = arith.constant 0 : index
    %c0_2 = arith.constant 0 : index
    %1 = vector.load %arg2[%c0_1, %c0_2] : memref<16x32xf32, #tpu.memory_space<vmem>>, vector<16x32xf32>
    %cst = arith.constant dense<0.000000e+00> : vector<64x32xf32>
    %2 = tpu.matmul %0, %1, %cst {dimension_numbers = #tpu.dot_dimension_numbers<[1], [0], [0], [1], [0, 0, 1, 1], [], []>} : vector<64x16xf32>, vector<16x32xf32>, vector<64x32xf32> -> vector<64x32xf32>
    %c0_3 = arith.constant 0 : index
    %c0_4 = arith.constant 0 : index
    %3 = vector.load %arg3[%c0_3, %c0_4] : memref<1x32xf32, #tpu.memory_space<vmem>>, vector<1x32xf32>
    %4 = vector.broadcast %3 : vector<1x32xf32> to vector<64x32xf32>
    %5 = arith.addf %2, %4 : vector<64x32xf32>
    %c0_5 = arith.constant 0 : index
    %c0_6 = arith.constant 0 : index
    %6 = vector.load %arg6[%c0_5, %c0_6] : memref<64x32xf32, #tpu.memory_space<vmem>>, vector<64x32xf32>
    tpu.vector_store %arg6[%c0_5, %c0_6], %5 {strides = array<i32>} : memref<64x32xf32, #tpu.memory_space<vmem>>, vector<64x32xf32>,
    %c0_7 = arith.constant 0 : index
    %c0_8 = arith.constant 0 : index
    %7 = vector.load %arg4[%c0_7, %c0_8] : memref<32x32xf32, #tpu.memory_space<vmem>>, vector<32x32xf32>
    %cst_9 = arith.constant 0.000000e+00 : f32
    %8 = vector.broadcast %cst_9 : f32 to vector<8x32xf32>
    %cst_10 = arith.constant 0.000000e+00 : f32
    %9 = vector.broadcast %cst_10 : f32 to vector<8x32xf32>
    %c0_11 = arith.constant 0 : index
    %c0_12 = arith.constant 0 : index
    %10 = vector.load %arg6[%c0_11, %c0_12] : memref<64x32xf32, #tpu.memory_space<vmem>>, vector<8x32xf32>
    %cst_13 = arith.constant dense<0.000000e+00> : vector<8x32xf32>
    %11 = tpu.matmul %8, %7, %cst_13 {dimension_numbers = #tpu.dot_dimension_numbers<[1], [0], [0], [1], [0, 0, 1, 1], [], []>} : vector<8x32xf32>, vector<32x32xf32>, vector<8x32xf32> -> vector<8x32xf32>
    %12 = arith.addf %11, %10 : vector<8x32xf32>
    %13 = arith.negf %12 : vector<8x32xf32>
    %14 = math.exp %13 : vector<8x32xf32>
    %cst_14 = arith.constant 1.000000e+00 : f32
    %15 = vector.broadcast %cst_14 : f32 to vector<8x32xf32>
    %16 = arith.addf %15, %14 : vector<8x32xf32>
    %17 = arith.divf %15, %16 : vector<8x32xf32>
    %18 = math.tanh %12 : vector<8x32xf32>
    %19 = arith.addf %9, %18 : vector<8x32xf32>
    %20 = arith.mulf %19, %17 : vector<8x32xf32>
    %21 = math.tanh %20 : vector<8x32xf32>
    %22 = arith.mulf %21, %17 : vector<8x32xf32>
    %c8 = arith.constant 8 : index
    %c0_15 = arith.constant 0 : index
    %23 = vector.load %arg6[%c8, %c0_15] : memref<64x32xf32, #tpu.memory_space<vmem>>, vector<8x32xf32>
    %cst_16 = arith.constant dense<0.000000e+00> : vector<8x32xf32>
    %24 = tpu.matmul %22, %7, %cst_16 {dimension_numbers = #tpu.dot_dimension_numbers<[1], [0], [0], [1], [0, 0, 1, 1], [], []>} : vector<8x32xf32>, vector<32x32xf32>, vector<8x32xf32> -> vector<8x32xf32>
    %25 = arith.addf %24, %23 : vector<8x32xf32>
    %26 = arith.negf %25 : vector<8x32xf32>
    %27 = math.exp %26 : vector<8x32xf32>
    %cst_17 = arith.constant 1.000000e+00 : f32
    %28 = vector.broadcast %cst_17 : f32 to vector<8x32xf32>
    %29 = arith.addf %28, %27 : vector<8x32xf32>
    %30 = arith.divf %28, %29 : vector<8x32xf32>
    %31 = math.tanh %25 : vector<8x32xf32>
    %32 = arith.addf %20, %31 : vector<8x32xf32>
    %33 = arith.mulf %32, %30 : vector<8x32xf32>
    %34 = math.tanh %33 : vector<8x32xf32>
    %35 = arith.mulf %34, %30 : vector<8x32xf32>
    %c16 = arith.constant 16 : index
    %c0_18 = arith.constant 0 : index
    %36 = vector.load %arg6[%c16, %c0_18] : memref<64x32xf32, #tpu.memory_space<vmem>>, vector<8x32xf32>
    %cst_19 = arith.constant dense<0.000000e+00> : vector<8x32xf32>
    %37 = tpu.matmul %35, %7, %cst_19 {dimension_numbers = #tpu.dot_dimension_numbers<[1], [0], [0], [1], [0, 0, 1, 1], [], []>} : vector<8x32xf32>, vector<32x32xf32>, vector<8x32xf32> -> vector<8x32xf32>
    %38 = arith.addf %37, %36 : vector<8x32xf32>
    %39 = arith.negf %38 : vector<8x32xf32>
    %40 = math.exp %39 : vector<8x32xf32>
    %cst_20 = arith.constant 1.000000e+00 : f32
    %41 = vector.broadcast %cst_20 : f32 to vector<8x32xf32>
    %42 = arith.addf %41, %40 : vector<8x32xf32>
    %43 = arith.divf %41, %42 : vector<8x32xf32>
    %44 = math.tanh %38 : vector<8x32xf32>
    %45 = arith.addf %33, %44 : vector<8x32xf32>
    %46 = arith.mulf %45, %43 : vector<8x32xf32>
    %47 = math.tanh %46 : vector<8x32xf32>
    %48 = arith.mulf %47, %43 : vector<8x32xf32>
    %c24 = arith.constant 24 : index
    %c0_21 = arith.constant 0 : index
    %49 = vector.load %arg6[%c24, %c0_21] : memref<64x32xf32, #tpu.memory_space<vmem>>, vector<8x32xf32>
    %cst_22 = arith.constant dense<0.000000e+00> : vector<8x32xf32>
    %50 = tpu.matmul %48, %7, %cst_22 {dimension_numbers = #tpu.dot_dimension_numbers<[1], [0], [0], [1], [0, 0, 1, 1], [], []>} : vector<8x32xf32>, vector<32x32xf32>, vector<8x32xf32> -> vector<8x32xf32>
    %51 = arith.addf %50, %49 : vector<8x32xf32>
    %52 = arith.negf %51 : vector<8x32xf32>
    %53 = math.exp %52 : vector<8x32xf32>
    %cst_23 = arith.constant 1.000000e+00 : f32
    %54 = vector.broadcast %cst_23 : f32 to vector<8x32xf32>
    %55 = arith.addf %54, %53 : vector<8x32xf32>
    %56 = arith.divf %54, %55 : vector<8x32xf32>
    %57 = math.tanh %51 : vector<8x32xf32>
    %58 = arith.addf %46, %57 : vector<8x32xf32>
    %59 = arith.mulf %58, %56 : vector<8x32xf32>
    %60 = math.tanh %59 : vector<8x32xf32>
    %61 = arith.mulf %60, %56 : vector<8x32xf32>
    %c32 = arith.constant 32 : index
    %c0_24 = arith.constant 0 : index
    %62 = vector.load %arg6[%c32, %c0_24] : memref<64x32xf32, #tpu.memory_space<vmem>>, vector<8x32xf32>
    %cst_25 = arith.constant dense<0.000000e+00> : vector<8x32xf32>
    %63 = tpu.matmul %61, %7, %cst_25 {dimension_numbers = #tpu.dot_dimension_numbers<[1], [0], [0], [1], [0, 0, 1, 1], [], []>} : vector<8x32xf32>, vector<32x32xf32>, vector<8x32xf32> -> vector<8x32xf32>
    %64 = arith.addf %63, %62 : vector<8x32xf32>
    %65 = arith.negf %64 : vector<8x32xf32>
    %66 = math.exp %65 : vector<8x32xf32>
    %cst_26 = arith.constant 1.000000e+00 : f32
    %67 = vector.broadcast %cst_26 : f32 to vector<8x32xf32>
    %68 = arith.addf %67, %66 : vector<8x32xf32>
    %69 = arith.divf %67, %68 : vector<8x32xf32>
    %70 = math.tanh %64 : vector<8x32xf32>
    %71 = arith.addf %59, %70 : vector<8x32xf32>
    %72 = arith.mulf %71, %69 : vector<8x32xf32>
    %73 = math.tanh %72 : vector<8x32xf32>
    %74 = arith.mulf %73, %69 : vector<8x32xf32>
    %c40 = arith.constant 40 : index
    %c0_27 = arith.constant 0 : index
    %75 = vector.load %arg6[%c40, %c0_27] : memref<64x32xf32, #tpu.memory_space<vmem>>, vector<8x32xf32>
    %cst_28 = arith.constant dense<0.000000e+00> : vector<8x32xf32>
    %76 = tpu.matmul %74, %7, %cst_28 {dimension_numbers = #tpu.dot_dimension_numbers<[1], [0], [0], [1], [0, 0, 1, 1], [], []>} : vector<8x32xf32>, vector<32x32xf32>, vector<8x32xf32> -> vector<8x32xf32>
    %77 = arith.addf %76, %75 : vector<8x32xf32>
    %78 = arith.negf %77 : vector<8x32xf32>
    %79 = math.exp %78 : vector<8x32xf32>
    %cst_29 = arith.constant 1.000000e+00 : f32
    %80 = vector.broadcast %cst_29 : f32 to vector<8x32xf32>
    %81 = arith.addf %80, %79 : vector<8x32xf32>
    %82 = arith.divf %80, %81 : vector<8x32xf32>
    %83 = math.tanh %77 : vector<8x32xf32>
    %84 = arith.addf %72, %83 : vector<8x32xf32>
    %85 = arith.mulf %84, %82 : vector<8x32xf32>
    %86 = math.tanh %85 : vector<8x32xf32>
    %87 = arith.mulf %86, %82 : vector<8x32xf32>
    %c48 = arith.constant 48 : index
    %c0_30 = arith.constant 0 : index
    %88 = vector.load %arg6[%c48, %c0_30] : memref<64x32xf32, #tpu.memory_space<vmem>>, vector<8x32xf32>
    %cst_31 = arith.constant dense<0.000000e+00> : vector<8x32xf32>
    %89 = tpu.matmul %87, %7, %cst_31 {dimension_numbers = #tpu.dot_dimension_numbers<[1], [0], [0], [1], [0, 0, 1, 1], [], []>} : vector<8x32xf32>, vector<32x32xf32>, vector<8x32xf32> -> vector<8x32xf32>
    %90 = arith.addf %89, %88 : vector<8x32xf32>
    %91 = arith.negf %90 : vector<8x32xf32>
    %92 = math.exp %91 : vector<8x32xf32>
    %cst_32 = arith.constant 1.000000e+00 : f32
    %93 = vector.broadcast %cst_32 : f32 to vector<8x32xf32>
    %94 = arith.addf %93, %92 : vector<8x32xf32>
    %95 = arith.divf %93, %94 : vector<8x32xf32>
    %96 = math.tanh %90 : vector<8x32xf32>
    %97 = arith.addf %85, %96 : vector<8x32xf32>
    %98 = arith.mulf %97, %95 : vector<8x32xf32>
    %99 = math.tanh %98 : vector<8x32xf32>
    %100 = arith.mulf %99, %95 : vector<8x32xf32>
    %c56 = arith.constant 56 : index
    %c0_33 = arith.constant 0 : index
    %101 = vector.load %arg6[%c56, %c0_33] : memref<64x32xf32, #tpu.memory_space<vmem>>, vector<8x32xf32>
    %cst_34 = arith.constant dense<0.000000e+00> : vector<8x32xf32>
    %102 = tpu.matmul %100, %7, %cst_34 {dimension_numbers = #tpu.dot_dimension_numbers<[1], [0], [0], [1], [0, 0, 1, 1], [], []>} : vector<8x32xf32>, vector<32x32xf32>, vector<8x32xf32> -> vector<8x32xf32>
    %103 = arith.addf %102, %101 : vector<8x32xf32>
    %104 = arith.negf %103 : vector<8x32xf32>
    %105 = math.exp %104 : vector<8x32xf32>
    %cst_35 = arith.constant 1.000000e+00 : f32
    %106 = vector.broadcast %cst_35 : f32 to vector<8x32xf32>
    %107 = arith.addf %106, %105 : vector<8x32xf32>
    %108 = arith.divf %106, %107 : vector<8x32xf32>
    %109 = math.tanh %103 : vector<8x32xf32>
    %110 = arith.addf %98, %109 : vector<8x32xf32>
    %111 = arith.mulf %110, %108 : vector<8x32xf32>
    %112 = math.tanh %111 : vector<8x32xf32>
    %113 = arith.mulf %112, %108 : vector<8x32xf32>
    %c0_36 = arith.constant 0 : index
    %c0_37 = arith.constant 0 : index
    %114 = vector.load %arg6[%c0_36, %c0_37] : memref<64x32xf32, #tpu.memory_space<vmem>>, vector<8x32xf32>
    %cst_38 = arith.constant dense<0.000000e+00> : vector<8x32xf32>
    %115 = tpu.matmul %113, %7, %cst_38 {dimension_numbers = #tpu.dot_dimension_numbers<[1], [0], [0], [1], [0, 0, 1, 1], [], []>} : vector<8x32xf32>, vector<32x32xf32>, vector<8x32xf32> -> vector<8x32xf32>
    %116 = arith.addf %115, %114 : vector<8x32xf32>
    %117 = arith.negf %116 : vector<8x32xf32>
    %118 = math.exp %117 : vector<8x32xf32>
    %cst_39 = arith.constant 1.000000e+00 : f32
    %119 = vector.broadcast %cst_39 : f32 to vector<8x32xf32>
    %120 = arith.addf %119, %118 : vector<8x32xf32>
    %121 = arith.divf %119, %120 : vector<8x32xf32>
    %122 = math.tanh %116 : vector<8x32xf32>
    %123 = arith.addf %111, %122 : vector<8x32xf32>
    %124 = arith.mulf %123, %121 : vector<8x32xf32>
    %125 = math.tanh %124 : vector<8x32xf32>
    %126 = arith.mulf %125, %121 : vector<8x32xf32>
    %c8_40 = arith.constant 8 : index
    %c0_41 = arith.constant 0 : index
    %127 = vector.load %arg6[%c8_40, %c0_41] : memref<64x32xf32, #tpu.memory_space<vmem>>, vector<8x32xf32>
    %cst_42 = arith.constant dense<0.000000e+00> : vector<8x32xf32>
    %128 = tpu.matmul %126, %7, %cst_42 {dimension_numbers = #tpu.dot_dimension_numbers<[1], [0], [0], [1], [0, 0, 1, 1], [], []>} : vector<8x32xf32>, vector<32x32xf32>, vector<8x32xf32> -> vector<8x32xf32>
    %129 = arith.addf %128, %127 : vector<8x32xf32>
    %130 = arith.negf %129 : vector<8x32xf32>
    %131 = math.exp %130 : vector<8x32xf32>
    %cst_43 = arith.constant 1.000000e+00 : f32
    %132 = vector.broadcast %cst_43 : f32 to vector<8x32xf32>
    %133 = arith.addf %132, %131 : vector<8x32xf32>
    %134 = arith.divf %132, %133 : vector<8x32xf32>
    %135 = math.tanh %129 : vector<8x32xf32>
    %136 = arith.addf %124, %135 : vector<8x32xf32>
    %137 = arith.mulf %136, %134 : vector<8x32xf32>
    %138 = math.tanh %137 : vector<8x32xf32>
    %139 = arith.mulf %138, %134 : vector<8x32xf32>
    %c16_44 = arith.constant 16 : index
    %c0_45 = arith.constant 0 : index
    %140 = vector.load %arg6[%c16_44, %c0_45] : memref<64x32xf32, #tpu.memory_space<vmem>>, vector<8x32xf32>
    %cst_46 = arith.constant dense<0.000000e+00> : vector<8x32xf32>
    %141 = tpu.matmul %139, %7, %cst_46 {dimension_numbers = #tpu.dot_dimension_numbers<[1], [0], [0], [1], [0, 0, 1, 1], [], []>} : vector<8x32xf32>, vector<32x32xf32>, vector<8x32xf32> -> vector<8x32xf32>
    %142 = arith.addf %141, %140 : vector<8x32xf32>
    %143 = arith.negf %142 : vector<8x32xf32>
    %144 = math.exp %143 : vector<8x32xf32>
    %cst_47 = arith.constant 1.000000e+00 : f32
    %145 = vector.broadcast %cst_47 : f32 to vector<8x32xf32>
    %146 = arith.addf %145, %144 : vector<8x32xf32>
    %147 = arith.divf %145, %146 : vector<8x32xf32>
    %148 = math.tanh %142 : vector<8x32xf32>
    %149 = arith.addf %137, %148 : vector<8x32xf32>
    %150 = arith.mulf %149, %147 : vector<8x32xf32>
    %151 = math.tanh %150 : vector<8x32xf32>
    %152 = arith.mulf %151, %147 : vector<8x32xf32>
    %c24_48 = arith.constant 24 : index
    %c0_49 = arith.constant 0 : index
    %153 = vector.load %arg6[%c24_48, %c0_49] : memref<64x32xf32, #tpu.memory_space<vmem>>, vector<8x32xf32>
    %cst_50 = arith.constant dense<0.000000e+00> : vector<8x32xf32>
    %154 = tpu.matmul %152, %7, %cst_50 {dimension_numbers = #tpu.dot_dimension_numbers<[1], [0], [0], [1], [0, 0, 1, 1], [], []>} : vector<8x32xf32>, vector<32x32xf32>, vector<8x32xf32> -> vector<8x32xf32>
    %155 = arith.addf %154, %153 : vector<8x32xf32>
    %156 = arith.negf %155 : vector<8x32xf32>
    %157 = math.exp %156 : vector<8x32xf32>
    %cst_51 = arith.constant 1.000000e+00 : f32
    %158 = vector.broadcast %cst_51 : f32 to vector<8x32xf32>
    %159 = arith.addf %158, %157 : vector<8x32xf32>
    %160 = arith.divf %158, %159 : vector<8x32xf32>
    %161 = math.tanh %155 : vector<8x32xf32>
    %162 = arith.addf %150, %161 : vector<8x32xf32>
    %163 = arith.mulf %162, %160 : vector<8x32xf32>
    %164 = math.tanh %163 : vector<8x32xf32>
    %165 = arith.mulf %164, %160 : vector<8x32xf32>
    %c32_52 = arith.constant 32 : index
    %c0_53 = arith.constant 0 : index
    %166 = vector.load %arg6[%c32_52, %c0_53] : memref<64x32xf32, #tpu.memory_space<vmem>>, vector<8x32xf32>
    %cst_54 = arith.constant dense<0.000000e+00> : vector<8x32xf32>
    %167 = tpu.matmul %165, %7, %cst_54 {dimension_numbers = #tpu.dot_dimension_numbers<[1], [0], [0], [1], [0, 0, 1, 1], [], []>} : vector<8x32xf32>, vector<32x32xf32>, vector<8x32xf32> -> vector<8x32xf32>
    %168 = arith.addf %167, %166 : vector<8x32xf32>
    %169 = arith.negf %168 : vector<8x32xf32>
    %170 = math.exp %169 : vector<8x32xf32>
    %cst_55 = arith.constant 1.000000e+00 : f32
    %171 = vector.broadcast %cst_55 : f32 to vector<8x32xf32>
    %172 = arith.addf %171, %170 : vector<8x32xf32>
    %173 = arith.divf %171, %172 : vector<8x32xf32>
    %174 = math.tanh %168 : vector<8x32xf32>
    %175 = arith.addf %163, %174 : vector<8x32xf32>
    %176 = arith.mulf %175, %173 : vector<8x32xf32>
    %177 = math.tanh %176 : vector<8x32xf32>
    %178 = arith.mulf %177, %173 : vector<8x32xf32>
    %c40_56 = arith.constant 40 : index
    %c0_57 = arith.constant 0 : index
    %179 = vector.load %arg6[%c40_56, %c0_57] : memref<64x32xf32, #tpu.memory_space<vmem>>, vector<8x32xf32>
    %cst_58 = arith.constant dense<0.000000e+00> : vector<8x32xf32>
    %180 = tpu.matmul %178, %7, %cst_58 {dimension_numbers = #tpu.dot_dimension_numbers<[1], [0], [0], [1], [0, 0, 1, 1], [], []>} : vector<8x32xf32>, vector<32x32xf32>, vector<8x32xf32> -> vector<8x32xf32>
    %181 = arith.addf %180, %179 : vector<8x32xf32>
    %182 = arith.negf %181 : vector<8x32xf32>
    %183 = math.exp %182 : vector<8x32xf32>
    %cst_59 = arith.constant 1.000000e+00 : f32
    %184 = vector.broadcast %cst_59 : f32 to vector<8x32xf32>
    %185 = arith.addf %184, %183 : vector<8x32xf32>
    %186 = arith.divf %184, %185 : vector<8x32xf32>
    %187 = math.tanh %181 : vector<8x32xf32>
    %188 = arith.addf %176, %187 : vector<8x32xf32>
    %189 = arith.mulf %188, %186 : vector<8x32xf32>
    %190 = math.tanh %189 : vector<8x32xf32>
    %191 = arith.mulf %190, %186 : vector<8x32xf32>
    %c48_60 = arith.constant 48 : index
    %c0_61 = arith.constant 0 : index
    %192 = vector.load %arg6[%c48_60, %c0_61] : memref<64x32xf32, #tpu.memory_space<vmem>>, vector<8x32xf32>
    %cst_62 = arith.constant dense<0.000000e+00> : vector<8x32xf32>
    %193 = tpu.matmul %191, %7, %cst_62 {dimension_numbers = #tpu.dot_dimension_numbers<[1], [0], [0], [1], [0, 0, 1, 1], [], []>} : vector<8x32xf32>, vector<32x32xf32>, vector<8x32xf32> -> vector<8x32xf32>
    %194 = arith.addf %193, %192 : vector<8x32xf32>
    %195 = arith.negf %194 : vector<8x32xf32>
    %196 = math.exp %195 : vector<8x32xf32>
    %cst_63 = arith.constant 1.000000e+00 : f32
    %197 = vector.broadcast %cst_63 : f32 to vector<8x32xf32>
    %198 = arith.addf %197, %196 : vector<8x32xf32>
    %199 = arith.divf %197, %198 : vector<8x32xf32>
    %200 = math.tanh %194 : vector<8x32xf32>
    %201 = arith.addf %189, %200 : vector<8x32xf32>
    %202 = arith.mulf %201, %199 : vector<8x32xf32>
    %203 = math.tanh %202 : vector<8x32xf32>
    %204 = arith.mulf %203, %199 : vector<8x32xf32>
    %c56_64 = arith.constant 56 : index
    %c0_65 = arith.constant 0 : index
    %205 = vector.load %arg6[%c56_64, %c0_65] : memref<64x32xf32, #tpu.memory_space<vmem>>, vector<8x32xf32>
    %cst_66 = arith.constant dense<0.000000e+00> : vector<8x32xf32>
    %206 = tpu.matmul %204, %7, %cst_66 {dimension_numbers = #tpu.dot_dimension_numbers<[1], [0], [0], [1], [0, 0, 1, 1], [], []>} : vector<8x32xf32>, vector<32x32xf32>, vector<8x32xf32> -> vector<8x32xf32>
    %207 = arith.addf %206, %205 : vector<8x32xf32>
    %208 = arith.negf %207 : vector<8x32xf32>
    %209 = math.exp %208 : vector<8x32xf32>
    %cst_67 = arith.constant 1.000000e+00 : f32
    %210 = vector.broadcast %cst_67 : f32 to vector<8x32xf32>
    %211 = arith.addf %210, %209 : vector<8x32xf32>
    %212 = arith.divf %210, %211 : vector<8x32xf32>
    %213 = math.tanh %207 : vector<8x32xf32>
    %214 = arith.addf %202, %213 : vector<8x32xf32>
    %215 = arith.mulf %214, %212 : vector<8x32xf32>
    %216 = math.tanh %215 : vector<8x32xf32>
    %217 = arith.mulf %216, %212 : vector<8x32xf32>
    %c0_68 = arith.constant 0 : index
    %c0_69 = arith.constant 0 : index
    %218 = vector.load %arg5[%c0_68, %c0_69] : memref<8x32xf32, #tpu.memory_space<vmem>>, vector<8x32xf32>
    tpu.vector_store %arg5[%c0_68, %c0_69], %217 {strides = array<i32>} : memref<8x32xf32, #tpu.memory_space<vmem>>, vector<8x32xf32>,
    return
  }
  func.func @transform_0(%arg0: i32) -> (i32, i32) {
    %c0_i32 = arith.constant 0 : i32
    %c0_i32_0 = arith.constant 0 : i32
    %c0_i32_1 = arith.constant 0 : i32
    return %c0_i32, %c0_i32_0 : i32, i32
  }
  func.func @transform_1(%arg0: i32) -> (i32, i32) {
    %c0_i32 = arith.constant 0 : i32
    %c0_i32_0 = arith.constant 0 : i32
    %c0_i32_1 = arith.constant 0 : i32
    return %c0_i32, %c0_i32_0 : i32, i32
  }
  func.func @transform_2(%arg0: i32) -> (i32, i32) {
    %c0_i32 = arith.constant 0 : i32
    %c0_i32_0 = arith.constant 0 : i32
    %c0_i32_1 = arith.constant 0 : i32
    return %c0_i32, %c0_i32_0 : i32, i32
  }
  func.func @transform_3(%arg0: i32) -> (i32, i32) {
    %c0_i32 = arith.constant 0 : i32
    %c0_i32_0 = arith.constant 0 : i32
    %c0_i32_1 = arith.constant 0 : i32
    return %c0_i32, %c0_i32_0 : i32, i32
  }
  func.func @transform_4(%arg0: i32) -> (i32, i32) {
    %c0_i32 = arith.constant 0 : i32
    %c0_i32_0 = arith.constant 0 : i32
    %c0_i32_1 = arith.constant 0 : i32
    return %c0_i32, %c0_i32_0 : i32, i32
  }
}

</mosaic_0001>

<llo_original>
// kernel: embed_rclstm_forward.1
$region0: #{embed_rclstm_forward.1}
  #allocation0 [shape = 'u32[]', space=smem, size = 0x4, offset = 0x4, fixed_abs, tag = 'smem constant byte address 0x4 - core index']
  #allocation1 [shape = 'u32[144,128]{1,0:T(1,128)}', space=vmem, size = 0x12000, scoped, tag = 'internal scratch']
  #allocation2 [shape = 'f32[64,32]{1,0:T(8,128)}', space=vmem, size = 0x8000, scoped, tag = 'scratch operand']
  %s0 = inlined_call_operand.vmem [shape: f32[64,16], index: 0, kind: input, shape index: {}]
  %s1 = inlined_call_operand.vmem [shape: f32[16,32], index: 1, kind: input, shape index: {}]
  %s2 = inlined_call_operand.vmem [shape: f32[1,32], index: 2, kind: input, shape index: {}]
  %s3 = inlined_call_operand.vmem [shape: f32[32,32], index: 3, kind: input, shape index: {}]
  %s4 = inlined_call_operand.vmem [shape: f32[8,32], index: 4, kind: output, shape index: {}]
  %s5 = sld [smem:[#allocation0]]
  $region26: #{embed_rclstm_forward.1} parent=0
    _
  %s7 = ssub.s32 1, %s5
  %s8 = scalar_select 0, %s7, %s5
  // Predicated region
  $region2: #{embed_rclstm_forward.1} parent=0 // pred_check
    _
  $region3: #{embed_rclstm_forward.1} parent=0 // pred_check_branch
    %10 = sbr.rel (0) target = $region5
  $region4: #{embed_rclstm_forward.1} parent=0 // pred_region
    _
  $region5: #{embed_rclstm_forward.1} parent=0 // pred_fallthru
    _
  // Predicated region
  $region6: #{embed_rclstm_forward.1} parent=0 // pred_check
    _
  $region7: #{embed_rclstm_forward.1} parent=0 // pred_check_branch
    %12 = sbr.rel (0) target = $region9
  $region8: #{embed_rclstm_forward.1} parent=0 // pred_region
    _
  $region9: #{embed_rclstm_forward.1} parent=0 // pred_fallthru
    _
  // Predicated region
  $region10: #{embed_rclstm_forward.1} parent=0 // pred_check
    _
  $region11: #{embed_rclstm_forward.1} parent=0 // pred_check_branch
    %14 = sbr.rel (0) target = $region13
  $region12: #{embed_rclstm_forward.1} parent=0 // pred_region
    _
  $region13: #{embed_rclstm_forward.1} parent=0 // pred_fallthru
    _
  // Predicated region
  $region14: #{embed_rclstm_forward.1} parent=0 // pred_check
    _
  $region15: #{embed_rclstm_forward.1} parent=0 // pred_check_branch
    %16 = sbr.rel (0) target = $region17
  $region16: #{embed_rclstm_forward.1} parent=0 // pred_region
    _
  $region17: #{embed_rclstm_forward.1} parent=0 // pred_fallthru
    _
  %v17 = vld [vmem:[%s0] sm:$0xff]
  %v18 = vld [vmem:[%s0 + $0x8] sm:$0xff]
  %v19 = vld [vmem:[%s0 + $0x10] sm:$0xff]
  %v20 = vld [vmem:[%s0 + $0x18] sm:$0xff]
  %v21 = vld [vmem:[%s0 + $0x20] sm:$0xff]
  %v22 = vld [vmem:[%s0 + $0x28] sm:$0xff]
  %v23 = vld [vmem:[%s0 + $0x30] sm:$0xff]
  %v24 = vld [vmem:[%s0 + $0x38] sm:$0xff]
  %v25 = vld [vmem:[%s1] sm:$0xff]
  %v26 = vld [vmem:[%s1 + $0x8] sm:$0xff]
  %v27 = vld [vmem:[%s2] sm:$0x1]
  %v29 = vlaneseq
  %v30 = vshrl.u32 %v29, 7
  %v31 = vsub.s32 0, %v30
  %v32 = vrot.slane %v27, %v31
  %vm34 = vcmask 130048
  %v36 = vsel %vm34, %v17, 0
  %v39 = vsel %vm34, %v18, 0
  %v42 = vsel %vm34, %v19, 0
  %v45 = vsel %vm34, %v20, 0
  %v48 = vsel %vm34, %v21, 0
  %v51 = vsel %vm34, %v22, 0
  %v54 = vsel %vm34, %v23, 0
  %v57 = vsel %vm34, %v24, 0
  %59 = vmatprep.subr.mxu0 0.0
  %60 = vmatpush1.msra.mxu0 0.0
  %61 = vmatprep.subr.mxu0 0.0
  %62 = vmatpush1.msra.mxu0 0.0
  %63 = vmatprep.subr.mxu0 0.0
  %64 = vmatpush1.msra.mxu0 0.0
  %65 = vmatprep.subr.mxu0 0.0
  %66 = vmatpush1.msra.mxu0 0.0
  %67 = vmatprep.subr.mxu0 0.0
  %68 = vmatpush1.msra.mxu0 0.0
  %69 = vmatprep.subr.mxu0 0.0
  %70 = vmatpush1.msra.mxu0 0.0
  %71 = vmatprep.subr.mxu0 0.0
  %72 = vmatpush1.msra.mxu0 0.0
  %73 = vmatprep.subr.mxu0 0.0
  %74 = vmatpush1.msra.mxu0 0.0
  %75 = vmatprep.subr.mxu0 0.0
  %76 = vmatpush1.msra.mxu0 0.0
  %77 = vmatprep.subr.mxu0 0.0
  %78 = vmatpush1.msra.mxu0 0.0
  %79 = vmatprep.subr.mxu0 0.0
  %80 = vmatpush1.msra.mxu0 0.0
  %81 = vmatprep.subr.mxu0 0.0
  %82 = vmatpush1.msra.mxu0 0.0
  %83 = vmatprep.subr.mxu0 0.0
  %84 = vmatpush1.msra.mxu0 0.0
  %85 = vmatprep.subr.mxu0 0.0
  %86 = vmatpush1.msra.mxu0 0.0
  %87 = vmatprep.subr.mxu0 0.0
  %88 = vmatpush1.msra.mxu0 %v26
  %89 = vmatprep.subr.mxu0 0.0
  %90 = vmatpush1.msra.mxu0 %v25
  %91 = vmatprep.subr.mxu0 0.0
  %92 = vmatpush2.msra.mxu0 0.0
  %93 = vmatprep.subr.mxu0 0.0
  %94 = vmatpush2.msra.mxu0 0.0
  %95 = vmatprep.subr.mxu0 0.0
  %96 = vmatpush2.msra.mxu0 0.0
  %97 = vmatprep.subr.mxu0 0.0
  %98 = vmatpush2.msra.mxu0 0.0
  %99 = vmatprep.subr.mxu0 0.0
  %100 = vmatpush2.msra.mxu0 0.0
  %101 = vmatprep.subr.mxu0 0.0
  %102 = vmatpush2.msra.mxu0 0.0
  %103 = vmatprep.subr.mxu0 0.0
  %104 = vmatpush2.msra.mxu0 0.0
  %105 = vmatprep.subr.mxu0 0.0
  %106 = vmatpush2.msra.mxu0 0.0
  %107 = vmatprep.subr.mxu0 0.0
  %108 = vmatpush2.msra.mxu0 0.0
  %109 = vmatprep.subr.mxu0 0.0
  %110 = vmatpush2.msra.mxu0 0.0
  %111 = vmatprep.subr.mxu0 0.0
  %112 = vmatpush2.msra.mxu0 0.0
  %113 = vmatprep.subr.mxu0 0.0
  %114 = vmatpush2.msra.mxu0 0.0
  %115 = vmatprep.subr.mxu0 0.0
  %116 = vmatpush2.msra.mxu0 0.0
  %117 = vmatprep.subr.mxu0 0.0
  %118 = vmatpush2.msra.mxu0 0.0
  %119 = vmatprep.subr.mxu0 0.0
  %120 = vmatpush2.msra.mxu0 0.0
  %121 = vmatprep.subr.mxu0 0.0
  %122 = vmatpush2.msra.mxu0 0.0
  %123 = vmatprep.mubr.f32.mxu0 0.0
  %124 = vmatmul.mubr.f32.gmra.mxu0 %v36
  %v125 = vpop.f32.mrf.mxu0
  %v126 = vadd.f32 %v32, %v125
  %v127 = vpop.f32.mrf.mxu0
  %128 = vmatprep.mubr.f32.mxu0 0.0
  %129 = vmatmul.mubr.f32.gmra.mxu0 %v39
  %v130 = vpop.f32.mrf.mxu0
  %v131 = vadd.f32 %v32, %v130
  %v132 = vpop.f32.mrf.mxu0
  %133 = vmatprep.mubr.f32.mxu0 0.0
  %134 = vmatmul.mubr.f32.gmra.mxu0 %v42
  %v135 = vpop.f32.mrf.mxu0
  %v136 = vadd.f32 %v32, %v135
  %v137 = vpop.f32.mrf.mxu0
  %138 = vmatprep.mubr.f32.mxu0 0.0
  %139 = vmatmul.mubr.f32.gmra.mxu0 %v45
  %v140 = vpop.f32.mrf.mxu0
  %v141 = vadd.f32 %v32, %v140
  %v142 = vpop.f32.mrf.mxu0
  %143 = vmatprep.mubr.f32.mxu0 0.0
  %144 = vmatmul.mubr.f32.gmra.mxu0 %v48
  %v145 = vpop.f32.mrf.mxu0
  %v146 = vadd.f32 %v32, %v145
  %v147 = vpop.f32.mrf.mxu0
  %148 = vmatprep.mubr.f32.mxu0 0.0
  %149 = vmatmul.mubr.f32.gmra.mxu0 %v51
  %v150 = vpop.f32.mrf.mxu0
  %v151 = vadd.f32 %v32, %v150
  %v152 = vpop.f32.mrf.mxu0
  %153 = vmatprep.mubr.f32.mxu0 0.0
  %154 = vmatmul.mubr.f32.gmra.mxu0 %v54
  %v155 = vpop.f32.mrf.mxu0
  %v156 = vadd.f32 %v32, %v155
  %v157 = vpop.f32.mrf.mxu0
  %158 = vmatprep.mubr.f32.mxu0 0.0
  %159 = vmatmul.mubr.f32.gmra.mxu0 %v57
  %v160 = vpop.f32.mrf.mxu0
  %v161 = vadd.f32 %v32, %v160
  %v162 = vpop.f32.mrf.mxu0
  %163 = vdwg.mxu0
  %vm164 = vcmask 261120
  %165 = vst.msk [vmem:[#allocation2] sm:$0xff] %vm164, %v126
  %166 = vst.msk [vmem:[#allocation2 + $0x8] sm:$0xff] %vm164, %v131
  %167 = vst.msk [vmem:[#allocation2 + $0x10] sm:$0xff] %vm164, %v136
  %168 = vst.msk [vmem:[#allocation2 + $0x18] sm:$0xff] %vm164, %v141
  %169 = vst.msk [vmem:[#allocation2 + $0x20] sm:$0xff] %vm164, %v146
  %170 = vst.msk [vmem:[#allocation2 + $0x28] sm:$0xff] %vm164, %v151
  %171 = vst.msk [vmem:[#allocation2 + $0x30] sm:$0xff] %vm164, %v156
  %172 = vst.msk [vmem:[#allocation2 + $0x38] sm:$0xff] %vm164, %v161
  %v173 = vld [vmem:[%s3] sm:$0xff]
  %v174 = vld [vmem:[%s3 + $0x8] sm:$0xff]
  %v175 = vld [vmem:[%s3 + $0x10] sm:$0xff]
  %v176 = vld [vmem:[%s3 + $0x18] sm:$0xff]
  %v177 = vld [vmem:[#allocation2] sm:$0xff]
  %v179 = vsel %vm164, 0.0, 0
  %181 = vmatprep.subr.mxu0 0.0
  %182 = vmatpush1.msra.mxu0 0.0
  %183 = vmatprep.subr.mxu0 0.0
  %184 = vmatpush1.msra.mxu0 0.0
  %185 = vmatprep.subr.mxu0 0.0
  %186 = vmatpush1.msra.mxu0 0.0
  %187 = vmatprep.subr.mxu0 0.0
  %188 = vmatpush1.msra.mxu0 0.0
  %189 = vmatprep.subr.mxu0 0.0
  %190 = vmatpush1.msra.mxu0 0.0
  %191 = vmatprep.subr.mxu0 0.0
  %192 = vmatpush1.msra.mxu0 0.0
  %193 = vmatprep.subr.mxu0 0.0
  %194 = vmatpush1.msra.mxu0 0.0
  %195 = vmatprep.subr.mxu0 0.0
  %196 = vmatpush1.msra.mxu0 0.0
  %197 = vmatprep.subr.mxu0 0.0
  %198 = vmatpush1.msra.mxu0 0.0
  %199 = vmatprep.subr.mxu0 0.0
  %200 = vmatpush1.msra.mxu0 0.0
  %201 = vmatprep.subr.mxu0 0.0
  %202 = vmatpush1.msra.mxu0 0.0
  %203 = vmatprep.subr.mxu0 0.0
  %204 = vmatpush1.msra.mxu0 0.0
  %205 = vmatprep.subr.mxu0 0.0
  %206 = vmatpush1.msra.mxu0 %v176
  %207 = vmatprep.subr.mxu0 0.0
  %208 = vmatpush1.msra.mxu0 %v175
  %209 = vmatprep.subr.mxu0 0.0
  %210 = vmatpush1.msra.mxu0 %v174
  %211 = vmatprep.subr.mxu0 0.0
  %212 = vmatpush1.msra.mxu0 %v173
  %213 = vmatprep.subr.mxu0 0.0
  %214 = vmatpush2.msra.mxu0 0.0
  %215 = vmatprep.subr.mxu0 0.0
  %216 = vmatpush2.msra.mxu0 0.0
  %217 = vmatprep.subr.mxu0 0.0
  %218 = vmatpush2.msra.mxu0 0.0
  %219 = vmatprep.subr.mxu0 0.0
  %220 = vmatpush2.msra.mxu0 0.0
  %221 = vmatprep.subr.mxu0 0.0
  %222 = vmatpush2.msra.mxu0 0.0
  %223 = vmatprep.subr.mxu0 0.0
  %224 = vmatpush2.msra.mxu0 0.0
  %225 = vmatprep.subr.mxu0 0.0
  %226 = vmatpush2.msra.mxu0 0.0
  %227 = vmatprep.subr.mxu0 0.0
  %228 = vmatpush2.msra.mxu0 0.0
  %229 = vmatprep.subr.mxu0 0.0
  %230 = vmatpush2.msra.mxu0 0.0
  %231 = vmatprep.subr.mxu0 0.0
  %232 = vmatpush2.msra.mxu0 0.0
  %233 = vmatprep.subr.mxu0 0.0
  %234 = vmatpush2.msra.mxu0 0.0
  %235 = vmatprep.subr.mxu0 0.0
  %236 = vmatpush2.msra.mxu0 0.0
  %237 = vmatprep.subr.mxu0 0.0
  %238 = vmatpush2.msra.mxu0 0.0
  %239 = vmatprep.subr.mxu0 0.0
  %240 = vmatpush2.msra.mxu0 0.0
  %241 = vmatprep.subr.mxu0 0.0
  %242 = vmatpush2.msra.mxu0 0.0
  %243 = vmatprep.subr.mxu0 0.0
  %244 = vmatpush2.msra.mxu0 0.0
  %245 = vmatprep.mubr.f32.mxu0 0.0
  %246 = vmatmul.mubr.f32.gmra.mxu0 %v179
  %v247 = vpop.f32.mrf.mxu0
  %v248 = vadd.f32 %v177, %v247
  %v249 = vpop.f32.mrf.mxu0
  %250 = vdwg.mxu0
  %v251 = vxor.u32 %v248, 2147483648
  %v252 = vmul.f32 %v251, 1.442695
  %v253 = vpow.pop %v252
  %v254 = vadd.f32 %v253, 1.0
  %v255 = vrcp.pop %v254
  %v256 = vmul.f32 1.0, %v255
  %v257 = vtanh.pop %v248
  %v258 = vadd.f32 %v257, 0.0
  %v259 = vmul.f32 %v258, %v256
  %v260 = vtanh.pop %v259
  %v261 = vmul.f32 %v260, %v256
  %v262 = vld [vmem:[#allocation2 + $0x8] sm:$0xff]
  %v264 = vsel %vm164, %v261, 0
  %266 = vmatprep.subr.mxu0 0.0
  %267 = vmatpush1.msra.mxu0 0.0
  %268 = vmatprep.subr.mxu0 0.0
  %269 = vmatpush1.msra.mxu0 0.0
  %270 = vmatprep.subr.mxu0 0.0
  %271 = vmatpush1.msra.mxu0 0.0
  %272 = vmatprep.subr.mxu0 0.0
  %273 = vmatpush1.msra.mxu0 0.0
  %274 = vmatprep.subr.mxu0 0.0
  %275 = vmatpush1.msra.mxu0 0.0
  %276 = vmatprep.subr.mxu0 0.0
  %277 = vmatpush1.msra.mxu0 0.0
  %278 = vmatprep.subr.mxu0 0.0
  %279 = vmatpush1.msra.mxu0 0.0
  %280 = vmatprep.subr.mxu0 0.0
  %281 = vmatpush1.msra.mxu0 0.0
  %282 = vmatprep.subr.mxu0 0.0
  %283 = vmatpush1.msra.mxu0 0.0
  %284 = vmatprep.subr.mxu0 0.0
  %285 = vmatpush1.msra.mxu0 0.0
  %286 = vmatprep.subr.mxu0 0.0
  %287 = vmatpush1.msra.mxu0 0.0
  %288 = vmatprep.subr.mxu0 0.0
  %289 = vmatpush1.msra.mxu0 0.0
  %290 = vmatprep.subr.mxu0 0.0
  %291 = vmatpush1.msra.mxu0 %v176
  %292 = vmatprep.subr.mxu0 0.0
  %293 = vmatpush1.msra.mxu0 %v175
  %294 = vmatprep.subr.mxu0 0.0
  %295 = vmatpush1.msra.mxu0 %v174
  %296 = vmatprep.subr.mxu0 0.0
  %297 = vmatpush1.msra.mxu0 %v173
  %298 = vmatprep.subr.mxu0 0.0
  %299 = vmatpush2.msra.mxu0 0.0
  %300 = vmatprep.subr.mxu0 0.0
  %301 = vmatpush2.msra.mxu0 0.0
  %302 = vmatprep.subr.mxu0 0.0
  %303 = vmatpush2.msra.mxu0 0.0
  %304 = vmatprep.subr.mxu0 0.0
  %305 = vmatpush2.msra.mxu0 0.0
  %306 = vmatprep.subr.mxu0 0.0
  %307 = vmatpush2.msra.mxu0 0.0
  %308 = vmatprep.subr.mxu0 0.0
  %309 = vmatpush2.msra.mxu0 0.0
  %310 = vmatprep.subr.mxu0 0.0
  %311 = vmatpush2.msra.mxu0 0.0
  %312 = vmatprep.subr.mxu0 0.0
  %313 = vmatpush2.msra.mxu0 0.0
  %314 = vmatprep.subr.mxu0 0.0
  %315 = vmatpush2.msra.mxu0 0.0
  %316 = vmatprep.subr.mxu0 0.0
  %317 = vmatpush2.msra.mxu0 0.0
  %318 = vmatprep.subr.mxu0 0.0
  %319 = vmatpush2.msra.mxu0 0.0
  %320 = vmatprep.subr.mxu0 0.0
  %321 = vmatpush2.msra.mxu0 0.0
  %322 = vmatprep.subr.mxu0 0.0
  %323 = vmatpush2.msra.mxu0 0.0
  %324 = vmatprep.subr.mxu0 0.0
  %325 = vmatpush2.msra.mxu0 0.0
  %326 = vmatprep.subr.mxu0 0.0
  %327 = vmatpush2.msra.mxu0 0.0
  %328 = vmatprep.subr.mxu0 0.0
  %329 = vmatpush2.msra.mxu0 0.0
  %330 = vmatprep.mubr.f32.mxu0 0.0
  %331 = vmatmul.mubr.f32.gmra.mxu0 %v264
  %v332 = vpop.f32.mrf.mxu0
  %v333 = vadd.f32 %v262, %v332
  %v334 = vpop.f32.mrf.mxu0
  %335 = vdwg.mxu0
  %v336 = vxor.u32 %v333, 2147483648
  %v337 = vmul.f32 %v336, 1.442695
  %v338 = vpow.pop %v337
  %v339 = vadd.f32 %v338, 1.0
  %v340 = vrcp.pop %v339
  %v341 = vmul.f32 1.0, %v340
  %v342 = vtanh.pop %v333
  %v343 = vadd.f32 %v259, %v342
  %v344 = vmul.f32 %v343, %v341
  %v345 = vtanh.pop %v344
  %v346 = vmul.f32 %v345, %v341
  %v347 = vld [vmem:[#allocation2 + $0x10] sm:$0xff]
  %v349 = vsel %vm164, %v346, 0
  %351 = vmatprep.subr.mxu0 0.0
  %352 = vmatpush1.msra.mxu0 0.0
  %353 = vmatprep.subr.mxu0 0.0
  %354 = vmatpush1.msra.mxu0 0.0
  %355 = vmatprep.subr.mxu0 0.0
  %356 = vmatpush1.msra.mxu0 0.0
  %357 = vmatprep.subr.mxu0 0.0
  %358 = vmatpush1.msra.mxu0 0.0
  %359 = vmatprep.subr.mxu0 0.0
  %360 = vmatpush1.msra.mxu0 0.0
  %361 = vmatprep.subr.mxu0 0.0
  %362 = vmatpush1.msra.mxu0 0.0
  %363 = vmatprep.subr.mxu0 0.0
  %364 = vmatpush1.msra.mxu0 0.0
  %365 = vmatprep.subr.mxu0 0.0
  %366 = vmatpush1.msra.mxu0 0.0
  %367 = vmatprep.subr.mxu0 0.0
  %368 = vmatpush1.msra.mxu0 0.0
  %369 = vmatprep.subr.mxu0 0.0
  %370 = vmatpush1.msra.mxu0 0.0
  %371 = vmatprep.subr.mxu0 0.0
  %372 = vmatpush1.msra.mxu0 0.0
  %373 = vmatprep.subr.mxu0 0.0
  %374 = vmatpush1.msra.mxu0 0.0
  %375 = vmatprep.subr.mxu0 0.0
  %376 = vmatpush1.msra.mxu0 %v176
  %377 = vmatprep.subr.mxu0 0.0
  %378 = vmatpush1.msra.mxu0 %v175
  %379 = vmatprep.subr.mxu0 0.0
  %380 = vmatpush1.msra.mxu0 %v174
  %381 = vmatprep.subr.mxu0 0.0
  %382 = vmatpush1.msra.mxu0 %v173
  %383 = vmatprep.subr.mxu0 0.0
  %384 = vmatpush2.msra.mxu0 0.0
  %385 = vmatprep.subr.mxu0 0.0
  %386 = vmatpush2.msra.mxu0 0.0
  %387 = vmatprep.subr.mxu0 0.0
  %388 = vmatpush2.msra.mxu0 0.0
  %389 = vmatprep.subr.mxu0 0.0
  %390 = vmatpush2.msra.mxu0 0.0
  %391 = vmatprep.subr.mxu0 0.0
  %392 = vmatpush2.msra.mxu0 0.0
  %393 = vmatprep.subr.mxu0 0.0
  %394 = vmatpush2.msra.mxu0 0.0
  %395 = vmatprep.subr.mxu0 0.0
  %396 = vmatpush2.msra.mxu0 0.0
  %397 = vmatprep.subr.mxu0 0.0
  %398 = vmatpush2.msra.mxu0 0.0
  %399 = vmatprep.subr.mxu0 0.0
  %400 = vmatpush2.msra.mxu0 0.0
  %401 = vmatprep.subr.mxu0 0.0
  %402 = vmatpush2.msra.mxu0 0.0
  %403 = vmatprep.subr.mxu0 0.0
  %404 = vmatpush2.msra.mxu0 0.0
  %405 = vmatprep.subr.mxu0 0.0
  %406 = vmatpush2.msra.mxu0 0.0
  %407 = vmatprep.subr.mxu0 0.0
  %408 = vmatpush2.msra.mxu0 0.0
  %409 = vmatprep.subr.mxu0 0.0
  %410 = vmatpush2.msra.mxu0 0.0
  %411 = vmatprep.subr.mxu0 0.0
  %412 = vmatpush2.msra.mxu0 0.0
  %413 = vmatprep.subr.mxu0 0.0
  %414 = vmatpush2.msra.mxu0 0.0
  %415 = vmatprep.mubr.f32.mxu0 0.0
  %416 = vmatmul.mubr.f32.gmra.mxu0 %v349
  %v417 = vpop.f32.mrf.mxu0
  %v418 = vadd.f32 %v347, %v417
  %v419 = vpop.f32.mrf.mxu0
  %420 = vdwg.mxu0
  %v421 = vxor.u32 %v418, 2147483648
  %v422 = vmul.f32 %v421, 1.442695
  %v423 = vpow.pop %v422
  %v424 = vadd.f32 %v423, 1.0
  %v425 = vrcp.pop %v424
  %v426 = vmul.f32 1.0, %v425
  %v427 = vtanh.pop %v418
  %v428 = vadd.f32 %v344, %v427
  %v429 = vmul.f32 %v428, %v426
  %v430 = vtanh.pop %v429
  %v431 = vmul.f32 %v430, %v426
  %v432 = vld [vmem:[#allocation2 + $0x18] sm:$0xff]
  %v434 = vsel %vm164, %v431, 0
  %436 = vmatprep.subr.mxu0 0.0
  %437 = vmatpush1.msra.mxu0 0.0
  %438 = vmatprep.subr.mxu0 0.0
  %439 = vmatpush1.msra.mxu0 0.0
  %440 = vmatprep.subr.mxu0 0.0
  %441 = vmatpush1.msra.mxu0 0.0
  %442 = vmatprep.subr.mxu0 0.0
  %443 = vmatpush1.msra.mxu0 0.0
  %444 = vmatprep.subr.mxu0 0.0
  %445 = vmatpush1.msra.mxu0 0.0
  %446 = vmatprep.subr.mxu0 0.0
  %447 = vmatpush1.msra.mxu0 0.0
  %448 = vmatprep.subr.mxu0 0.0
  %449 = vmatpush1.msra.mxu0 0.0
  %450 = vmatprep.subr.mxu0 0.0
  %451 = vmatpush1.msra.mxu0 0.0
  %452 = vmatprep.subr.mxu0 0.0
  %453 = vmatpush1.msra.mxu0 0.0
  %454 = vmatprep.subr.mxu0 0.0
  %455 = vmatpush1.msra.mxu0 0.0
  %456 = vmatprep.subr.mxu0 0.0
  %457 = vmatpush1.msra.mxu0 0.0
  %458 = vmatprep.subr.mxu0 0.0
  %459 = vmatpush1.msra.mxu0 0.0
  %460 = vmatprep.subr.mxu0 0.0
  %461 = vmatpush1.msra.mxu0 %v176
  %462 = vmatprep.subr.mxu0 0.0
  %463 = vmatpush1.msra.mxu0 %v175
  %464 = vmatprep.subr.mxu0 0.0
  %465 = vmatpush1.msra.mxu0 %v174
  %466 = vmatprep.subr.mxu0 0.0
  %467 = vmatpush1.msra.mxu0 %v173
  %468 = vmatprep.subr.mxu0 0.0
  %469 = vmatpush2.msra.mxu0 0.0
  %470 = vmatprep.subr.mxu0 0.0
  %471 = vmatpush2.msra.mxu0 0.0
  %472 = vmatprep.subr.mxu0 0.0
  %473 = vmatpush2.msra.mxu0 0.0
  %474 = vmatprep.subr.mxu0 0.0
  %475 = vmatpush2.msra.mxu0 0.0
  %476 = vmatprep.subr.mxu0 0.0
  %477 = vmatpush2.msra.mxu0 0.0
  %478 = vmatprep.subr.mxu0 0.0
  %479 = vmatpush2.msra.mxu0 0.0
  %480 = vmatprep.subr.mxu0 0.0
  %481 = vmatpush2.msra.mxu0 0.0
  %482 = vmatprep.subr.mxu0 0.0
  %483 = vmatpush2.msra.mxu0 0.0
  %484 = vmatprep.subr.mxu0 0.0
  %485 = vmatpush2.msra.mxu0 0.0
  %486 = vmatprep.subr.mxu0 0.0
  %487 = vmatpush2.msra.mxu0 0.0
  %488 = vmatprep.subr.mxu0 0.0
  %489 = vmatpush2.msra.mxu0 0.0
  %490 = vmatprep.subr.mxu0 0.0
  %491 = vmatpush2.msra.mxu0 0.0
  %492 = vmatprep.subr.mxu0 0.0
  %493 = vmatpush2.msra.mxu0 0.0
  %494 = vmatprep.subr.mxu0 0.0
  %495 = vmatpush2.msra.mxu0 0.0
  %496 = vmatprep.subr.mxu0 0.0
  %497 = vmatpush2.msra.mxu0 0.0
  %498 = vmatprep.subr.mxu0 0.0
  %499 = vmatpush2.msra.mxu0 0.0
  %500 = vmatprep.mubr.f32.mxu0 0.0
  %501 = vmatmul.mubr.f32.gmra.mxu0 %v434
  %v502 = vpop.f32.mrf.mxu0
  %v503 = vadd.f32 %v432, %v502
  %v504 = vpop.f32.mrf.mxu0
  %505 = vdwg.mxu0
  %v506 = vxor.u32 %v503, 2147483648
  %v507 = vmul.f32 %v506, 1.442695
  %v508 = vpow.pop %v507
  %v509 = vadd.f32 %v508, 1.0
  %v510 = vrcp.pop %v509
  %v511 = vmul.f32 1.0, %v510
  %v512 = vtanh.pop %v503
  %v513 = vadd.f32 %v429, %v512
  %v514 = vmul.f32 %v513, %v511
  %v515 = vtanh.pop %v514
  %v516 = vmul.f32 %v515, %v511
  %v517 = vld [vmem:[#allocation2 + $0x20] sm:$0xff]
  %v519 = vsel %vm164, %v516, 0
  %521 = vmatprep.subr.mxu0 0.0
  %522 = vmatpush1.msra.mxu0 0.0
  %523 = vmatprep.subr.mxu0 0.0
  %524 = vmatpush1.msra.mxu0 0.0
  %525 = vmatprep.subr.mxu0 0.0
  %526 = vmatpush1.msra.mxu0 0.0
  %527 = vmatprep.subr.mxu0 0.0
  %528 = vmatpush1.msra.mxu0 0.0
  %529 = vmatprep.subr.mxu0 0.0
  %530 = vmatpush1.msra.mxu0 0.0
  %531 = vmatprep.subr.mxu0 0.0
  %532 = vmatpush1.msra.mxu0 0.0
  %533 = vmatprep.subr.mxu0 0.0
  %534 = vmatpush1.msra.mxu0 0.0
  %535 = vmatprep.subr.mxu0 0.0
  %536 = vmatpush1.msra.mxu0 0.0
  %537 = vmatprep.subr.mxu0 0.0
  %538 = vmatpush1.msra.mxu0 0.0
  %539 = vmatprep.subr.mxu0 0.0
  %540 = vmatpush1.msra.mxu0 0.0
  %541 = vmatprep.subr.mxu0 0.0
  %542 = vmatpush1.msra.mxu0 0.0
  %543 = vmatprep.subr.mxu0 0.0
  %544 = vmatpush1.msra.mxu0 0.0
  %545 = vmatprep.subr.mxu0 0.0
  %546 = vmatpush1.msra.mxu0 %v176
  %547 = vmatprep.subr.mxu0 0.0
  %548 = vmatpush1.msra.mxu0 %v175
  %549 = vmatprep.subr.mxu0 0.0
  %550 = vmatpush1.msra.mxu0 %v174
  %551 = vmatprep.subr.mxu0 0.0
  %552 = vmatpush1.msra.mxu0 %v173
  %553 = vmatprep.subr.mxu0 0.0
  %554 = vmatpush2.msra.mxu0 0.0
  %555 = vmatprep.subr.mxu0 0.0
  %556 = vmatpush2.msra.mxu0 0.0
  %557 = vmatprep.subr.mxu0 0.0
  %558 = vmatpush2.msra.mxu0 0.0
  %559 = vmatprep.subr.mxu0 0.0
  %560 = vmatpush2.msra.mxu0 0.0
  %561 = vmatprep.subr.mxu0 0.0
  %562 = vmatpush2.msra.mxu0 0.0
  %563 = vmatprep.subr.mxu0 0.0
  %564 = vmatpush2.msra.mxu0 0.0
  %565 = vmatprep.subr.mxu0 0.0
  %566 = vmatpush2.msra.mxu0 0.0
  %567 = vmatprep.subr.mxu0 0.0
  %568 = vmatpush2.msra.mxu0 0.0
  %569 = vmatprep.subr.mxu0 0.0
  %570 = vmatpush2.msra.mxu0 0.0
  %571 = vmatprep.subr.mxu0 0.0
  %572 = vmatpush2.msra.mxu0 0.0
  %573 = vmatprep.subr.mxu0 0.0
  %574 = vmatpush2.msra.mxu0 0.0
  %575 = vmatprep.subr.mxu0 0.0
  %576 = vmatpush2.msra.mxu0 0.0
  %577 = vmatprep.subr.mxu0 0.0
  %578 = vmatpush2.msra.mxu0 0.0
  %579 = vmatprep.subr.mxu0 0.0
  %580 = vmatpush2.msra.mxu0 0.0
  %581 = vmatprep.subr.mxu0 0.0
  %582 = vmatpush2.msra.mxu0 0.0
  %583 = vmatprep.subr.mxu0 0.0
  %584 = vmatpush2.msra.mxu0 0.0
  %585 = vmatprep.mubr.f32.mxu0 0.0
  %586 = vmatmul.mubr.f32.gmra.mxu0 %v519
  %v587 = vpop.f32.mrf.mxu0
  %v588 = vadd.f32 %v517, %v587
  %v589 = vpop.f32.mrf.mxu0
  %590 = vdwg.mxu0
  %v591 = vxor.u32 %v588, 2147483648
  %v592 = vmul.f32 %v591, 1.442695
  %v593 = vpow.pop %v592
  %v594 = vadd.f32 %v593, 1.0
  %v595 = vrcp.pop %v594
  %v596 = vmul.f32 1.0, %v595
  %v597 = vtanh.pop %v588
  %v598 = vadd.f32 %v514, %v597
  %v599 = vmul.f32 %v598, %v596
  %v600 = vtanh.pop %v599
  %v601 = vmul.f32 %v600, %v596
  %v602 = vld [vmem:[#allocation2 + $0x28] sm:$0xff]
  %v604 = vsel %vm164, %v601, 0
  %606 = vmatprep.subr.mxu0 0.0
  %607 = vmatpush1.msra.mxu0 0.0
  %608 = vmatprep.subr.mxu0 0.0
  %609 = vmatpush1.msra.mxu0 0.0
  %610 = vmatprep.subr.mxu0 0.0
  %611 = vmatpush1.msra.mxu0 0.0
  %612 = vmatprep.subr.mxu0 0.0
  %613 = vmatpush1.msra.mxu0 0.0
  %614 = vmatprep.subr.mxu0 0.0
  %615 = vmatpush1.msra.mxu0 0.0
  %616 = vmatprep.subr.mxu0 0.0
  %617 = vmatpush1.msra.mxu0 0.0
  %618 = vmatprep.subr.mxu0 0.0
  %619 = vmatpush1.msra.mxu0 0.0
  %620 = vmatprep.subr.mxu0 0.0
  %621 = vmatpush1.msra.mxu0 0.0
  %622 = vmatprep.subr.mxu0 0.0
  %623 = vmatpush1.msra.mxu0 0.0
  %624 = vmatprep.subr.mxu0 0.0
  %625 = vmatpush1.msra.mxu0 0.0
  %626 = vmatprep.subr.mxu0 0.0
  %627 = vmatpush1.msra.mxu0 0.0
  %628 = vmatprep.subr.mxu0 0.0
  %629 = vmatpush1.msra.mxu0 0.0
  %630 = vmatprep.subr.mxu0 0.0
  %631 = vmatpush1.msra.mxu0 %v176
  %632 = vmatprep.subr.mxu0 0.0
  %633 = vmatpush1.msra.mxu0 %v175
  %634 = vmatprep.subr.mxu0 0.0
  %635 = vmatpush1.msra.mxu0 %v174
  %636 = vmatprep.subr.mxu0 0.0
  %637 = vmatpush1.msra.mxu0 %v173
  %638 = vmatprep.subr.mxu0 0.0
  %639 = vmatpush2.msra.mxu0 0.0
  %640 = vmatprep.subr.mxu0 0.0
  %641 = vmatpush2.msra.mxu0 0.0
  %642 = vmatprep.subr.mxu0 0.0
  %643 = vmatpush2.msra.mxu0 0.0
  %644 = vmatprep.subr.mxu0 0.0
  %645 = vmatpush2.msra.mxu0 0.0
  %646 = vmatprep.subr.mxu0 0.0
  %647 = vmatpush2.msra.mxu0 0.0
  %648 = vmatprep.subr.mxu0 0.0
  %649 = vmatpush2.msra.mxu0 0.0
  %650 = vmatprep.subr.mxu0 0.0
  %651 = vmatpush2.msra.mxu0 0.0
  %652 = vmatprep.subr.mxu0 0.0
  %653 = vmatpush2.msra.mxu0 0.0
  %654 = vmatprep.subr.mxu0 0.0
  %655 = vmatpush2.msra.mxu0 0.0
  %656 = vmatprep.subr.mxu0 0.0
  %657 = vmatpush2.msra.mxu0 0.0
  %658 = vmatprep.subr.mxu0 0.0
  %659 = vmatpush2.msra.mxu0 0.0
  %660 = vmatprep.subr.mxu0 0.0
  %661 = vmatpush2.msra.mxu0 0.0
  %662 = vmatprep.subr.mxu0 0.0
  %663 = vmatpush2.msra.mxu0 0.0
  %664 = vmatprep.subr.mxu0 0.0
  %665 = vmatpush2.msra.mxu0 0.0
  %666 = vmatprep.subr.mxu0 0.0
  %667 = vmatpush2.msra.mxu0 0.0
  %668 = vmatprep.subr.mxu0 0.0
  %669 = vmatpush2.msra.mxu0 0.0
  %670 = vmatprep.mubr.f32.mxu0 0.0
  %671 = vmatmul.mubr.f32.gmra.mxu0 %v604
  %v672 = vpop.f32.mrf.mxu0
  %v673 = vadd.f32 %v602, %v672
  %v674 = vpop.f32.mrf.mxu0
  %675 = vdwg.mxu0
  %v676 = vxor.u32 %v673, 2147483648
  %v677 = vmul.f32 %v676, 1.442695
  %v678 = vpow.pop %v677
  %v679 = vadd.f32 %v678, 1.0
  %v680 = vrcp.pop %v679
  %v681 = vmul.f32 1.0, %v680
  %v682 = vtanh.pop %v673
  %v683 = vadd.f32 %v599, %v682
  %v684 = vmul.f32 %v683, %v681
  %v685 = vtanh.pop %v684
  %v686 = vmul.f32 %v685, %v681
  %v687 = vld [vmem:[#allocation2 + $0x30] sm:$0xff]
  %v689 = vsel %vm164, %v686, 0
  %691 = vmatprep.subr.mxu0 0.0
  %692 = vmatpush1.msra.mxu0 0.0
  %693 = vmatprep.subr.mxu0 0.0
  %694 = vmatpush1.msra.mxu0 0.0
  %695 = vmatprep.subr.mxu0 0.0
  %696 = vmatpush1.msra.mxu0 0.0
  %697 = vmatprep.subr.mxu0 0.0
  %698 = vmatpush1.msra.mxu0 0.0
  %699 = vmatprep.subr.mxu0 0.0
  %700 = vmatpush1.msra.mxu0 0.0
  %701 = vmatprep.subr.mxu0 0.0
  %702 = vmatpush1.msra.mxu0 0.0
  %703 = vmatprep.subr.mxu0 0.0
  %704 = vmatpush1.msra.mxu0 0.0
  %705 = vmatprep.subr.mxu0 0.0
  %706 = vmatpush1.msra.mxu0 0.0
  %707 = vmatprep.subr.mxu0 0.0
  %708 = vmatpush1.msra.mxu0 0.0
  %709 = vmatprep.subr.mxu0 0.0
  %710 = vmatpush1.msra.mxu0 0.0
  %711 = vmatprep.subr.mxu0 0.0
  %712 = vmatpush1.msra.mxu0 0.0
  %713 = vmatprep.subr.mxu0 0.0
  %714 = vmatpush1.msra.mxu0 0.0
  %715 = vmatprep.subr.mxu0 0.0
  %716 = vmatpush1.msra.mxu0 %v176
  %717 = vmatprep.subr.mxu0 0.0
  %718 = vmatpush1.msra.mxu0 %v175
  %719 = vmatprep.subr.mxu0 0.0
  %720 = vmatpush1.msra.mxu0 %v174
  %721 = vmatprep.subr.mxu0 0.0
  %722 = vmatpush1.msra.mxu0 %v173
  %723 = vmatprep.subr.mxu0 0.0
  %724 = vmatpush2.msra.mxu0 0.0
  %725 = vmatprep.subr.mxu0 0.0
  %726 = vmatpush2.msra.mxu0 0.0
  %727 = vmatprep.subr.mxu0 0.0
  %728 = vmatpush2.msra.mxu0 0.0
  %729 = vmatprep.subr.mxu0 0.0
  %730 = vmatpush2.msra.mxu0 0.0
  %731 = vmatprep.subr.mxu0 0.0
  %732 = vmatpush2.msra.mxu0 0.0
  %733 = vmatprep.subr.mxu0 0.0
  %734 = vmatpush2.msra.mxu0 0.0
  %735 = vmatprep.subr.mxu0 0.0
  %736 = vmatpush2.msra.mxu0 0.0
  %737 = vmatprep.subr.mxu0 0.0
  %738 = vmatpush2.msra.mxu0 0.0
  %739 = vmatprep.subr.mxu0 0.0
  %740 = vmatpush2.msra.mxu0 0.0
  %741 = vmatprep.subr.mxu0 0.0
  %742 = vmatpush2.msra.mxu0 0.0
  %743 = vmatprep.subr.mxu0 0.0
  %744 = vmatpush2.msra.mxu0 0.0
  %745 = vmatprep.subr.mxu0 0.0
  %746 = vmatpush2.msra.mxu0 0.0
  %747 = vmatprep.subr.mxu0 0.0
  %748 = vmatpush2.msra.mxu0 0.0
  %749 = vmatprep.subr.mxu0 0.0
  %750 = vmatpush2.msra.mxu0 0.0
  %751 = vmatprep.subr.mxu0 0.0
  %752 = vmatpush2.msra.mxu0 0.0
  %753 = vmatprep.subr.mxu0 0.0
  %754 = vmatpush2.msra.mxu0 0.0
  %755 = vmatprep.mubr.f32.mxu0 0.0
  %756 = vmatmul.mubr.f32.gmra.mxu0 %v689
  %v757 = vpop.f32.mrf.mxu0
  %v758 = vadd.f32 %v687, %v757
  %v759 = vpop.f32.mrf.mxu0
  %760 = vdwg.mxu0
  %v761 = vxor.u32 %v758, 2147483648
  %v762 = vmul.f32 %v761, 1.442695
  %v763 = vpow.pop %v762
  %v764 = vadd.f32 %v763, 1.0
  %v765 = vrcp.pop %v764
  %v766 = vmul.f32 1.0, %v765
  %v767 = vtanh.pop %v758
  %v768 = vadd.f32 %v684, %v767
  %v769 = vmul.f32 %v768, %v766
  %v770 = vtanh.pop %v769
  %v771 = vmul.f32 %v770, %v766
  %v772 = vld [vmem:[#allocation2 + $0x38] sm:$0xff]
  %v774 = vsel %vm164, %v771, 0
  %776 = vmatprep.subr.mxu0 0.0
  %777 = vmatpush1.msra.mxu0 0.0
  %778 = vmatprep.subr.mxu0 0.0
  %779 = vmatpush1.msra.mxu0 0.0
  %780 = vmatprep.subr.mxu0 0.0
  %781 = vmatpush1.msra.mxu0 0.0
  %782 = vmatprep.subr.mxu0 0.0
  %783 = vmatpush1.msra.mxu0 0.0
  %784 = vmatprep.subr.mxu0 0.0
  %785 = vmatpush1.msra.mxu0 0.0
  %786 = vmatprep.subr.mxu0 0.0
  %787 = vmatpush1.msra.mxu0 0.0
  %788 = vmatprep.subr.mxu0 0.0
  %789 = vmatpush1.msra.mxu0 0.0
  %790 = vmatprep.subr.mxu0 0.0
  %791 = vmatpush1.msra.mxu0 0.0
  %792 = vmatprep.subr.mxu0 0.0
  %793 = vmatpush1.msra.mxu0 0.0
  %794 = vmatprep.subr.mxu0 0.0
  %795 = vmatpush1.msra.mxu0 0.0
  %796 = vmatprep.subr.mxu0 0.0
  %797 = vmatpush1.msra.mxu0 0.0
  %798 = vmatprep.subr.mxu0 0.0
  %799 = vmatpush1.msra.mxu0 0.0
  %800 = vmatprep.subr.mxu0 0.0
  %801 = vmatpush1.msra.mxu0 %v176
  %802 = vmatprep.subr.mxu0 0.0
  %803 = vmatpush1.msra.mxu0 %v175
  %804 = vmatprep.subr.mxu0 0.0
  %805 = vmatpush1.msra.mxu0 %v174
  %806 = vmatprep.subr.mxu0 0.0
  %807 = vmatpush1.msra.mxu0 %v173
  %808 = vmatprep.subr.mxu0 0.0
  %809 = vmatpush2.msra.mxu0 0.0
  %810 = vmatprep.subr.mxu0 0.0
  %811 = vmatpush2.msra.mxu0 0.0
  %812 = vmatprep.subr.mxu0 0.0
  %813 = vmatpush2.msra.mxu0 0.0
  %814 = vmatprep.subr.mxu0 0.0
  %815 = vmatpush2.msra.mxu0 0.0
  %816 = vmatprep.subr.mxu0 0.0
  %817 = vmatpush2.msra.mxu0 0.0
  %818 = vmatprep.subr.mxu0 0.0
  %819 = vmatpush2.msra.mxu0 0.0
  %820 = vmatprep.subr.mxu0 0.0
  %821 = vmatpush2.msra.mxu0 0.0
  %822 = vmatprep.subr.mxu0 0.0
  %823 = vmatpush2.msra.mxu0 0.0
  %824 = vmatprep.subr.mxu0 0.0
  %825 = vmatpush2.msra.mxu0 0.0
  %826 = vmatprep.subr.mxu0 0.0
  %827 = vmatpush2.msra.mxu0 0.0
  %828 = vmatprep.subr.mxu0 0.0
  %829 = vmatpush2.msra.mxu0 0.0
  %830 = vmatprep.subr.mxu0 0.0
  %831 = vmatpush2.msra.mxu0 0.0
  %832 = vmatprep.subr.mxu0 0.0
  %833 = vmatpush2.msra.mxu0 0.0
  %834 = vmatprep.subr.mxu0 0.0
  %835 = vmatpush2.msra.mxu0 0.0
  %836 = vmatprep.subr.mxu0 0.0
  %837 = vmatpush2.msra.mxu0 0.0
  %838 = vmatprep.subr.mxu0 0.0
  %839 = vmatpush2.msra.mxu0 0.0
  %840 = vmatprep.mubr.f32.mxu0 0.0
  %841 = vmatmul.mubr.f32.gmra.mxu0 %v774
  %v842 = vpop.f32.mrf.mxu0
  %v843 = vadd.f32 %v772, %v842
  %v844 = vpop.f32.mrf.mxu0
  %845 = vdwg.mxu0
  %v846 = vxor.u32 %v843, 2147483648
  %v847 = vmul.f32 %v846, 1.442695
  %v848 = vpow.pop %v847
  %v849 = vadd.f32 %v848, 1.0
  %v850 = vrcp.pop %v849
  %v851 = vmul.f32 1.0, %v850
  %v852 = vtanh.pop %v843
  %v853 = vadd.f32 %v769, %v852
  %v854 = vmul.f32 %v853, %v851
  %v855 = vtanh.pop %v854
  %v856 = vmul.f32 %v855, %v851
  %v858 = vsel %vm164, %v856, 0
  %860 = vmatprep.subr.mxu0 0.0
  %861 = vmatpush1.msra.mxu0 0.0
  %862 = vmatprep.subr.mxu0 0.0
  %863 = vmatpush1.msra.mxu0 0.0
  %864 = vmatprep.subr.mxu0 0.0
  %865 = vmatpush1.msra.mxu0 0.0
  %866 = vmatprep.subr.mxu0 0.0
  %867 = vmatpush1.msra.mxu0 0.0
  %868 = vmatprep.subr.mxu0 0.0
  %869 = vmatpush1.msra.mxu0 0.0
  %870 = vmatprep.subr.mxu0 0.0
  %871 = vmatpush1.msra.mxu0 0.0
  %872 = vmatprep.subr.mxu0 0.0
  %873 = vmatpush1.msra.mxu0 0.0
  %874 = vmatprep.subr.mxu0 0.0
  %875 = vmatpush1.msra.mxu0 0.0
  %876 = vmatprep.subr.mxu0 0.0
  %877 = vmatpush1.msra.mxu0 0.0
  %878 = vmatprep.subr.mxu0 0.0
  %879 = vmatpush1.msra.mxu0 0.0
  %880 = vmatprep.subr.mxu0 0.0
  %881 = vmatpush1.msra.mxu0 0.0
  %882 = vmatprep.subr.mxu0 0.0
  %883 = vmatpush1.msra.mxu0 0.0
  %884 = vmatprep.subr.mxu0 0.0
  %885 = vmatpush1.msra.mxu0 %v176
  %886 = vmatprep.subr.mxu0 0.0
  %887 = vmatpush1.msra.mxu0 %v175
  %888 = vmatprep.subr.mxu0 0.0
  %889 = vmatpush1.msra.mxu0 %v174
  %890 = vmatprep.subr.mxu0 0.0
  %891 = vmatpush1.msra.mxu0 %v173
  %892 = vmatprep.subr.mxu0 0.0
  %893 = vmatpush2.msra.mxu0 0.0
  %894 = vmatprep.subr.mxu0 0.0
  %895 = vmatpush2.msra.mxu0 0.0
  %896 = vmatprep.subr.mxu0 0.0
  %897 = vmatpush2.msra.mxu0 0.0
  %898 = vmatprep.subr.mxu0 0.0
  %899 = vmatpush2.msra.mxu0 0.0
  %900 = vmatprep.subr.mxu0 0.0
  %901 = vmatpush2.msra.mxu0 0.0
  %902 = vmatprep.subr.mxu0 0.0
  %903 = vmatpush2.msra.mxu0 0.0
  %904 = vmatprep.subr.mxu0 0.0
  %905 = vmatpush2.msra.mxu0 0.0
  %906 = vmatprep.subr.mxu0 0.0
  %907 = vmatpush2.msra.mxu0 0.0
  %908 = vmatprep.subr.mxu0 0.0
  %909 = vmatpush2.msra.mxu0 0.0
  %910 = vmatprep.subr.mxu0 0.0
  %911 = vmatpush2.msra.mxu0 0.0
  %912 = vmatprep.subr.mxu0 0.0
  %913 = vmatpush2.msra.mxu0 0.0
  %914 = vmatprep.subr.mxu0 0.0
  %915 = vmatpush2.msra.mxu0 0.0
  %916 = vmatprep.subr.mxu0 0.0
  %917 = vmatpush2.msra.mxu0 0.0
  %918 = vmatprep.subr.mxu0 0.0
  %919 = vmatpush2.msra.mxu0 0.0
  %920 = vmatprep.subr.mxu0 0.0
  %921 = vmatpush2.msra.mxu0 0.0
  %922 = vmatprep.subr.mxu0 0.0
  %923 = vmatpush2.msra.mxu0 0.0
  %924 = vmatprep.mubr.f32.mxu0 0.0
  %925 = vmatmul.mubr.f32.gmra.mxu0 %v858
  %v926 = vpop.f32.mrf.mxu0
  %v927 = vadd.f32 %v177, %v926
  %v928 = vpop.f32.mrf.mxu0
  %929 = vdwg.mxu0
  %v930 = vxor.u32 %v927, 2147483648
  %v931 = vmul.f32 %v930, 1.442695
  %v932 = vpow.pop %v931
  %v933 = vadd.f32 %v932, 1.0
  %v934 = vrcp.pop %v933
  %v935 = vmul.f32 1.0, %v934
  %v936 = vtanh.pop %v927
  %v937 = vadd.f32 %v854, %v936
  %v938 = vmul.f32 %v937, %v935
  %v939 = vtanh.pop %v938
  %v940 = vmul.f32 %v939, %v935
  %v942 = vsel %vm164, %v940, 0
  %944 = vmatprep.subr.mxu0 0.0
  %945 = vmatpush1.msra.mxu0 0.0
  %946 = vmatprep.subr.mxu0 0.0
  %947 = vmatpush1.msra.mxu0 0.0
  %948 = vmatprep.subr.mxu0 0.0
  %949 = vmatpush1.msra.mxu0 0.0
  %950 = vmatprep.subr.mxu0 0.0
  %951 = vmatpush1.msra.mxu0 0.0
  %952 = vmatprep.subr.mxu0 0.0
  %953 = vmatpush1.msra.mxu0 0.0
  %954 = vmatprep.subr.mxu0 0.0
  %955 = vmatpush1.msra.mxu0 0.0
  %956 = vmatprep.subr.mxu0 0.0
  %957 = vmatpush1.msra.mxu0 0.0
  %958 = vmatprep.subr.mxu0 0.0
  %959 = vmatpush1.msra.mxu0 0.0
  %960 = vmatprep.subr.mxu0 0.0
  %961 = vmatpush1.msra.mxu0 0.0
  %962 = vmatprep.subr.mxu0 0.0
  %963 = vmatpush1.msra.mxu0 0.0
  %964 = vmatprep.subr.mxu0 0.0
  %965 = vmatpush1.msra.mxu0 0.0
  %966 = vmatprep.subr.mxu0 0.0
  %967 = vmatpush1.msra.mxu0 0.0
  %968 = vmatprep.subr.mxu0 0.0
  %969 = vmatpush1.msra.mxu0 %v176
  %970 = vmatprep.subr.mxu0 0.0
  %971 = vmatpush1.msra.mxu0 %v175
  %972 = vmatprep.subr.mxu0 0.0
  %973 = vmatpush1.msra.mxu0 %v174
  %974 = vmatprep.subr.mxu0 0.0
  %975 = vmatpush1.msra.mxu0 %v173
  %976 = vmatprep.subr.mxu0 0.0
  %977 = vmatpush2.msra.mxu0 0.0
  %978 = vmatprep.subr.mxu0 0.0
  %979 = vmatpush2.msra.mxu0 0.0
  %980 = vmatprep.subr.mxu0 0.0
  %981 = vmatpush2.msra.mxu0 0.0
  %982 = vmatprep.subr.mxu0 0.0
  %983 = vmatpush2.msra.mxu0 0.0
  %984 = vmatprep.subr.mxu0 0.0
  %985 = vmatpush2.msra.mxu0 0.0
  %986 = vmatprep.subr.mxu0 0.0
  %987 = vmatpush2.msra.mxu0 0.0
  %988 = vmatprep.subr.mxu0 0.0
  %989 = vmatpush2.msra.mxu0 0.0
  %990 = vmatprep.subr.mxu0 0.0
  %991 = vmatpush2.msra.mxu0 0.0
  %992 = vmatprep.subr.mxu0 0.0
  %993 = vmatpush2.msra.mxu0 0.0
  %994 = vmatprep.subr.mxu0 0.0
  %995 = vmatpush2.msra.mxu0 0.0
  %996 = vmatprep.subr.mxu0 0.0
  %997 = vmatpush2.msra.mxu0 0.0
  %998 = vmatprep.subr.mxu0 0.0
  %999 = vmatpush2.msra.mxu0 0.0
  %1000 = vmatprep.subr.mxu0 0.0
  %1001 = vmatpush2.msra.mxu0 0.0
  %1002 = vmatprep.subr.mxu0 0.0
  %1003 = vmatpush2.msra.mxu0 0.0
  %1004 = vmatprep.subr.mxu0 0.0
  %1005 = vmatpush2.msra.mxu0 0.0
  %1006 = vmatprep.subr.mxu0 0.0
  %1007 = vmatpush2.msra.mxu0 0.0
  %1008 = vmatprep.mubr.f32.mxu0 0.0
  %1009 = vmatmul.mubr.f32.gmra.mxu0 %v942
  %v1010 = vpop.f32.mrf.mxu0
  %v1011 = vadd.f32 %v262, %v1010
  %v1012 = vpop.f32.mrf.mxu0
  %1013 = vdwg.mxu0
  %v1014 = vxor.u32 %v1011, 2147483648
  %v1015 = vmul.f32 %v1014, 1.442695
  %v1016 = vpow.pop %v1015
  %v1017 = vadd.f32 %v1016, 1.0
  %v1018 = vrcp.pop %v1017
  %v1019 = vmul.f32 1.0, %v1018
  %v1020 = vtanh.pop %v1011
  %v1021 = vadd.f32 %v938, %v1020
  %v1022 = vmul.f32 %v1021, %v1019
  %v1023 = vtanh.pop %v1022
  %v1024 = vmul.f32 %v1023, %v1019
  %v1026 = vsel %vm164, %v1024, 0
  %1028 = vmatprep.subr.mxu0 0.0
  %1029 = vmatpush1.msra.mxu0 0.0
  %1030 = vmatprep.subr.mxu0 0.0
  %1031 = vmatpush1.msra.mxu0 0.0
  %1032 = vmatprep.subr.mxu0 0.0
  %1033 = vmatpush1.msra.mxu0 0.0
  %1034 = vmatprep.subr.mxu0 0.0
  %1035 = vmatpush1.msra.mxu0 0.0
  %1036 = vmatprep.subr.mxu0 0.0
  %1037 = vmatpush1.msra.mxu0 0.0
  %1038 = vmatprep.subr.mxu0 0.0
  %1039 = vmatpush1.msra.mxu0 0.0
  %1040 = vmatprep.subr.mxu0 0.0
  %1041 = vmatpush1.msra.mxu0 0.0
  %1042 = vmatprep.subr.mxu0 0.0
  %1043 = vmatpush1.msra.mxu0 0.0
  %1044 = vmatprep.subr.mxu0 0.0
  %1045 = vmatpush1.msra.mxu0 0.0
  %1046 = vmatprep.subr.mxu0 0.0
  %1047 = vmatpush1.msra.mxu0 0.0
  %1048 = vmatprep.subr.mxu0 0.0
  %1049 = vmatpush1.msra.mxu0 0.0
  %1050 = vmatprep.subr.mxu0 0.0
  %1051 = vmatpush1.msra.mxu0 0.0
  %1052 = vmatprep.subr.mxu0 0.0
  %1053 = vmatpush1.msra.mxu0 %v176
  %1054 = vmatprep.subr.mxu0 0.0
  %1055 = vmatpush1.msra.mxu0 %v175
  %1056 = vmatprep.subr.mxu0 0.0
  %1057 = vmatpush1.msra.mxu0 %v174
  %1058 = vmatprep.subr.mxu0 0.0
  %1059 = vmatpush1.msra.mxu0 %v173
  %1060 = vmatprep.subr.mxu0 0.0
  %1061 = vmatpush2.msra.mxu0 0.0
  %1062 = vmatprep.subr.mxu0 0.0
  %1063 = vmatpush2.msra.mxu0 0.0
  %1064 = vmatprep.subr.mxu0 0.0
  %1065 = vmatpush2.msra.mxu0 0.0
  %1066 = vmatprep.subr.mxu0 0.0
  %1067 = vmatpush2.msra.mxu0 0.0
  %1068 = vmatprep.subr.mxu0 0.0
  %1069 = vmatpush2.msra.mxu0 0.0
  %1070 = vmatprep.subr.mxu0 0.0
  %1071 = vmatpush2.msra.mxu0 0.0
  %1072 = vmatprep.subr.mxu0 0.0
  %1073 = vmatpush2.msra.mxu0 0.0
  %1074 = vmatprep.subr.mxu0 0.0
  %1075 = vmatpush2.msra.mxu0 0.0
  %1076 = vmatprep.subr.mxu0 0.0
  %1077 = vmatpush2.msra.mxu0 0.0
  %1078 = vmatprep.subr.mxu0 0.0
  %1079 = vmatpush2.msra.mxu0 0.0
  %1080 = vmatprep.subr.mxu0 0.0
  %1081 = vmatpush2.msra.mxu0 0.0
  %1082 = vmatprep.subr.mxu0 0.0
  %1083 = vmatpush2.msra.mxu0 0.0
  %1084 = vmatprep.subr.mxu0 0.0
  %1085 = vmatpush2.msra.mxu0 0.0
  %1086 = vmatprep.subr.mxu0 0.0
  %1087 = vmatpush2.msra.mxu0 0.0
  %1088 = vmatprep.subr.mxu0 0.0
  %1089 = vmatpush2.msra.mxu0 0.0
  %1090 = vmatprep.subr.mxu0 0.0
  %1091 = vmatpush2.msra.mxu0 0.0
  %1092 = vmatprep.mubr.f32.mxu0 0.0
  %1093 = vmatmul.mubr.f32.gmra.mxu0 %v1026
  %v1094 = vpop.f32.mrf.mxu0
  %v1095 = vadd.f32 %v347, %v1094
  %v1096 = vpop.f32.mrf.mxu0
  %1097 = vdwg.mxu0
  %v1098 = vxor.u32 %v1095, 2147483648
  %v1099 = vmul.f32 %v1098, 1.442695
  %v1100 = vpow.pop %v1099
  %v1101 = vadd.f32 %v1100, 1.0
  %v1102 = vrcp.pop %v1101
  %v1103 = vmul.f32 1.0, %v1102
  %v1104 = vtanh.pop %v1095
  %v1105 = vadd.f32 %v1022, %v1104
  %v1106 = vmul.f32 %v1105, %v1103
  %v1107 = vtanh.pop %v1106
  %v1108 = vmul.f32 %v1107, %v1103
  %v1110 = vsel %vm164, %v1108, 0
  %1112 = vmatprep.subr.mxu0 0.0
  %1113 = vmatpush1.msra.mxu0 0.0
  %1114 = vmatprep.subr.mxu0 0.0
  %1115 = vmatpush1.msra.mxu0 0.0
  %1116 = vmatprep.subr.mxu0 0.0
  %1117 = vmatpush1.msra.mxu0 0.0
  %1118 = vmatprep.subr.mxu0 0.0
  %1119 = vmatpush1.msra.mxu0 0.0
  %1120 = vmatprep.subr.mxu0 0.0
  %1121 = vmatpush1.msra.mxu0 0.0
  %1122 = vmatprep.subr.mxu0 0.0
  %1123 = vmatpush1.msra.mxu0 0.0
  %1124 = vmatprep.subr.mxu0 0.0
  %1125 = vmatpush1.msra.mxu0 0.0
  %1126 = vmatprep.subr.mxu0 0.0
  %1127 = vmatpush1.msra.mxu0 0.0
  %1128 = vmatprep.subr.mxu0 0.0
  %1129 = vmatpush1.msra.mxu0 0.0
  %1130 = vmatprep.subr.mxu0 0.0
  %1131 = vmatpush1.msra.mxu0 0.0
  %1132 = vmatprep.subr.mxu0 0.0
  %1133 = vmatpush1.msra.mxu0 0.0
  %1134 = vmatprep.subr.mxu0 0.0
  %1135 = vmatpush1.msra.mxu0 0.0
  %1136 = vmatprep.subr.mxu0 0.0
  %1137 = vmatpush1.msra.mxu0 %v176
  %1138 = vmatprep.subr.mxu0 0.0
  %1139 = vmatpush1.msra.mxu0 %v175
  %1140 = vmatprep.subr.mxu0 0.0
  %1141 = vmatpush1.msra.mxu0 %v174
  %1142 = vmatprep.subr.mxu0 0.0
  %1143 = vmatpush1.msra.mxu0 %v173
  %1144 = vmatprep.subr.mxu0 0.0
  %1145 = vmatpush2.msra.mxu0 0.0
  %1146 = vmatprep.subr.mxu0 0.0
  %1147 = vmatpush2.msra.mxu0 0.0
  %1148 = vmatprep.subr.mxu0 0.0
  %1149 = vmatpush2.msra.mxu0 0.0
  %1150 = vmatprep.subr.mxu0 0.0
  %1151 = vmatpush2.msra.mxu0 0.0
  %1152 = vmatprep.subr.mxu0 0.0
  %1153 = vmatpush2.msra.mxu0 0.0
  %1154 = vmatprep.subr.mxu0 0.0
  %1155 = vmatpush2.msra.mxu0 0.0
  %1156 = vmatprep.subr.mxu0 0.0
  %1157 = vmatpush2.msra.mxu0 0.0
  %1158 = vmatprep.subr.mxu0 0.0
  %1159 = vmatpush2.msra.mxu0 0.0
  %1160 = vmatprep.subr.mxu0 0.0
  %1161 = vmatpush2.msra.mxu0 0.0
  %1162 = vmatprep.subr.mxu0 0.0
  %1163 = vmatpush2.msra.mxu0 0.0
  %1164 = vmatprep.subr.mxu0 0.0
  %1165 = vmatpush2.msra.mxu0 0.0
  %1166 = vmatprep.subr.mxu0 0.0
  %1167 = vmatpush2.msra.mxu0 0.0
  %1168 = vmatprep.subr.mxu0 0.0
  %1169 = vmatpush2.msra.mxu0 0.0
  %1170 = vmatprep.subr.mxu0 0.0
  %1171 = vmatpush2.msra.mxu0 0.0
  %1172 = vmatprep.subr.mxu0 0.0
  %1173 = vmatpush2.msra.mxu0 0.0
  %1174 = vmatprep.subr.mxu0 0.0
  %1175 = vmatpush2.msra.mxu0 0.0
  %1176 = vmatprep.mubr.f32.mxu0 0.0
  %1177 = vmatmul.mubr.f32.gmra.mxu0 %v1110
  %v1178 = vpop.f32.mrf.mxu0
  %v1179 = vadd.f32 %v432, %v1178
  %v1180 = vpop.f32.mrf.mxu0
  %1181 = vdwg.mxu0
  %v1182 = vxor.u32 %v1179, 2147483648
  %v1183 = vmul.f32 %v1182, 1.442695
  %v1184 = vpow.pop %v1183
  %v1185 = vadd.f32 %v1184, 1.0
  %v1186 = vrcp.pop %v1185
  %v1187 = vmul.f32 1.0, %v1186
  %v1188 = vtanh.pop %v1179
  %v1189 = vadd.f32 %v1106, %v1188
  %v1190 = vmul.f32 %v1189, %v1187
  %v1191 = vtanh.pop %v1190
  %v1192 = vmul.f32 %v1191, %v1187
  %v1194 = vsel %vm164, %v1192, 0
  %1196 = vmatprep.subr.mxu0 0.0
  %1197 = vmatpush1.msra.mxu0 0.0
  %1198 = vmatprep.subr.mxu0 0.0
  %1199 = vmatpush1.msra.mxu0 0.0
  %1200 = vmatprep.subr.mxu0 0.0
  %1201 = vmatpush1.msra.mxu0 0.0
  %1202 = vmatprep.subr.mxu0 0.0
  %1203 = vmatpush1.msra.mxu0 0.0
  %1204 = vmatprep.subr.mxu0 0.0
  %1205 = vmatpush1.msra.mxu0 0.0
  %1206 = vmatprep.subr.mxu0 0.0
  %1207 = vmatpush1.msra.mxu0 0.0
  %1208 = vmatprep.subr.mxu0 0.0
  %1209 = vmatpush1.msra.mxu0 0.0
  %1210 = vmatprep.subr.mxu0 0.0
  %1211 = vmatpush1.msra.mxu0 0.0
  %1212 = vmatprep.subr.mxu0 0.0
  %1213 = vmatpush1.msra.mxu0 0.0
  %1214 = vmatprep.subr.mxu0 0.0
  %1215 = vmatpush1.msra.mxu0 0.0
  %1216 = vmatprep.subr.mxu0 0.0
  %1217 = vmatpush1.msra.mxu0 0.0
  %1218 = vmatprep.subr.mxu0 0.0
  %1219 = vmatpush1.msra.mxu0 0.0
  %1220 = vmatprep.subr.mxu0 0.0
  %1221 = vmatpush1.msra.mxu0 %v176
  %1222 = vmatprep.subr.mxu0 0.0
  %1223 = vmatpush1.msra.mxu0 %v175
  %1224 = vmatprep.subr.mxu0 0.0
  %1225 = vmatpush1.msra.mxu0 %v174
  %1226 = vmatprep.subr.mxu0 0.0
  %1227 = vmatpush1.msra.mxu0 %v173
  %1228 = vmatprep.subr.mxu0 0.0
  %1229 = vmatpush2.msra.mxu0 0.0
  %1230 = vmatprep.subr.mxu0 0.0
  %1231 = vmatpush2.msra.mxu0 0.0
  %1232 = vmatprep.subr.mxu0 0.0
  %1233 = vmatpush2.msra.mxu0 0.0
  %1234 = vmatprep.subr.mxu0 0.0
  %1235 = vmatpush2.msra.mxu0 0.0
  %1236 = vmatprep.subr.mxu0 0.0
  %1237 = vmatpush2.msra.mxu0 0.0
  %1238 = vmatprep.subr.mxu0 0.0
  %1239 = vmatpush2.msra.mxu0 0.0
  %1240 = vmatprep.subr.mxu0 0.0
  %1241 = vmatpush2.msra.mxu0 0.0
  %1242 = vmatprep.subr.mxu0 0.0
  %1243 = vmatpush2.msra.mxu0 0.0
  %1244 = vmatprep.subr.mxu0 0.0
  %1245 = vmatpush2.msra.mxu0 0.0
  %1246 = vmatprep.subr.mxu0 0.0
  %1247 = vmatpush2.msra.mxu0 0.0
  %1248 = vmatprep.subr.mxu0 0.0
  %1249 = vmatpush2.msra.mxu0 0.0
  %1250 = vmatprep.subr.mxu0 0.0
  %1251 = vmatpush2.msra.mxu0 0.0
  %1252 = vmatprep.subr.mxu0 0.0
  %1253 = vmatpush2.msra.mxu0 0.0
  %1254 = vmatprep.subr.mxu0 0.0
  %1255 = vmatpush2.msra.mxu0 0.0
  %1256 = vmatprep.subr.mxu0 0.0
  %1257 = vmatpush2.msra.mxu0 0.0
  %1258 = vmatprep.subr.mxu0 0.0
  %1259 = vmatpush2.msra.mxu0 0.0
  %1260 = vmatprep.mubr.f32.mxu0 0.0
  %1261 = vmatmul.mubr.f32.gmra.mxu0 %v1194
  %v1262 = vpop.f32.mrf.mxu0
  %v1263 = vadd.f32 %v517, %v1262
  %v1264 = vpop.f32.mrf.mxu0
  %1265 = vdwg.mxu0
  %v1266 = vxor.u32 %v1263, 2147483648
  %v1267 = vmul.f32 %v1266, 1.442695
  %v1268 = vpow.pop %v1267
  %v1269 = vadd.f32 %v1268, 1.0
  %v1270 = vrcp.pop %v1269
  %v1271 = vmul.f32 1.0, %v1270
  %v1272 = vtanh.pop %v1263
  %v1273 = vadd.f32 %v1190, %v1272
  %v1274 = vmul.f32 %v1273, %v1271
  %v1275 = vtanh.pop %v1274
  %v1276 = vmul.f32 %v1275, %v1271
  %v1278 = vsel %vm164, %v1276, 0
  %1280 = vmatprep.subr.mxu0 0.0
  %1281 = vmatpush1.msra.mxu0 0.0
  %1282 = vmatprep.subr.mxu0 0.0
  %1283 = vmatpush1.msra.mxu0 0.0
  %1284 = vmatprep.subr.mxu0 0.0
  %1285 = vmatpush1.msra.mxu0 0.0
  %1286 = vmatprep.subr.mxu0 0.0
  %1287 = vmatpush1.msra.mxu0 0.0
  %1288 = vmatprep.subr.mxu0 0.0
  %1289 = vmatpush1.msra.mxu0 0.0
  %1290 = vmatprep.subr.mxu0 0.0
  %1291 = vmatpush1.msra.mxu0 0.0
  %1292 = vmatprep.subr.mxu0 0.0
  %1293 = vmatpush1.msra.mxu0 0.0
  %1294 = vmatprep.subr.mxu0 0.0
  %1295 = vmatpush1.msra.mxu0 0.0
  %1296 = vmatprep.subr.mxu0 0.0
  %1297 = vmatpush1.msra.mxu0 0.0
  %1298 = vmatprep.subr.mxu0 0.0
  %1299 = vmatpush1.msra.mxu0 0.0
  %1300 = vmatprep.subr.mxu0 0.0
  %1301 = vmatpush1.msra.mxu0 0.0
  %1302 = vmatprep.subr.mxu0 0.0
  %1303 = vmatpush1.msra.mxu0 0.0
  %1304 = vmatprep.subr.mxu0 0.0
  %1305 = vmatpush1.msra.mxu0 %v176
  %1306 = vmatprep.subr.mxu0 0.0
  %1307 = vmatpush1.msra.mxu0 %v175
  %1308 = vmatprep.subr.mxu0 0.0
  %1309 = vmatpush1.msra.mxu0 %v174
  %1310 = vmatprep.subr.mxu0 0.0
  %1311 = vmatpush1.msra.mxu0 %v173
  %1312 = vmatprep.subr.mxu0 0.0
  %1313 = vmatpush2.msra.mxu0 0.0
  %1314 = vmatprep.subr.mxu0 0.0
  %1315 = vmatpush2.msra.mxu0 0.0
  %1316 = vmatprep.subr.mxu0 0.0
  %1317 = vmatpush2.msra.mxu0 0.0
  %1318 = vmatprep.subr.mxu0 0.0
  %1319 = vmatpush2.msra.mxu0 0.0
  %1320 = vmatprep.subr.mxu0 0.0
  %1321 = vmatpush2.msra.mxu0 0.0
  %1322 = vmatprep.subr.mxu0 0.0
  %1323 = vmatpush2.msra.mxu0 0.0
  %1324 = vmatprep.subr.mxu0 0.0
  %1325 = vmatpush2.msra.mxu0 0.0
  %1326 = vmatprep.subr.mxu0 0.0
  %1327 = vmatpush2.msra.mxu0 0.0
  %1328 = vmatprep.subr.mxu0 0.0
  %1329 = vmatpush2.msra.mxu0 0.0
  %1330 = vmatprep.subr.mxu0 0.0
  %1331 = vmatpush2.msra.mxu0 0.0
  %1332 = vmatprep.subr.mxu0 0.0
  %1333 = vmatpush2.msra.mxu0 0.0
  %1334 = vmatprep.subr.mxu0 0.0
  %1335 = vmatpush2.msra.mxu0 0.0
  %1336 = vmatprep.subr.mxu0 0.0
  %1337 = vmatpush2.msra.mxu0 0.0
  %1338 = vmatprep.subr.mxu0 0.0
  %1339 = vmatpush2.msra.mxu0 0.0
  %1340 = vmatprep.subr.mxu0 0.0
  %1341 = vmatpush2.msra.mxu0 0.0
  %1342 = vmatprep.subr.mxu0 0.0
  %1343 = vmatpush2.msra.mxu0 0.0
  %1344 = vmatprep.mubr.f32.mxu0 0.0
  %1345 = vmatmul.mubr.f32.gmra.mxu0 %v1278
  %v1346 = vpop.f32.mrf.mxu0
  %v1347 = vadd.f32 %v602, %v1346
  %v1348 = vpop.f32.mrf.mxu0
  %1349 = vdwg.mxu0
  %v1350 = vxor.u32 %v1347, 2147483648
  %v1351 = vmul.f32 %v1350, 1.442695
  %v1352 = vpow.pop %v1351
  %v1353 = vadd.f32 %v1352, 1.0
  %v1354 = vrcp.pop %v1353
  %v1355 = vmul.f32 1.0, %v1354
  %v1356 = vtanh.pop %v1347
  %v1357 = vadd.f32 %v1274, %v1356
  %v1358 = vmul.f32 %v1357, %v1355
  %v1359 = vtanh.pop %v1358
  %v1360 = vmul.f32 %v1359, %v1355
  %v1362 = vsel %vm164, %v1360, 0
  %1364 = vmatprep.subr.mxu0 0.0
  %1365 = vmatpush1.msra.mxu0 0.0
  %1366 = vmatprep.subr.mxu0 0.0
  %1367 = vmatpush1.msra.mxu0 0.0
  %1368 = vmatprep.subr.mxu0 0.0
  %1369 = vmatpush1.msra.mxu0 0.0
  %1370 = vmatprep.subr.mxu0 0.0
  %1371 = vmatpush1.msra.mxu0 0.0
  %1372 = vmatprep.subr.mxu0 0.0
  %1373 = vmatpush1.msra.mxu0 0.0
  %1374 = vmatprep.subr.mxu0 0.0
  %1375 = vmatpush1.msra.mxu0 0.0
  %1376 = vmatprep.subr.mxu0 0.0
  %1377 = vmatpush1.msra.mxu0 0.0
  %1378 = vmatprep.subr.mxu0 0.0
  %1379 = vmatpush1.msra.mxu0 0.0
  %1380 = vmatprep.subr.mxu0 0.0
  %1381 = vmatpush1.msra.mxu0 0.0
  %1382 = vmatprep.subr.mxu0 0.0
  %1383 = vmatpush1.msra.mxu0 0.0
  %1384 = vmatprep.subr.mxu0 0.0
  %1385 = vmatpush1.msra.mxu0 0.0
  %1386 = vmatprep.subr.mxu0 0.0
  %1387 = vmatpush1.msra.mxu0 0.0
  %1388 = vmatprep.subr.mxu0 0.0
  %1389 = vmatpush1.msra.mxu0 %v176
  %1390 = vmatprep.subr.mxu0 0.0
  %1391 = vmatpush1.msra.mxu0 %v175
  %1392 = vmatprep.subr.mxu0 0.0
  %1393 = vmatpush1.msra.mxu0 %v174
  %1394 = vmatprep.subr.mxu0 0.0
  %1395 = vmatpush1.msra.mxu0 %v173
  %1396 = vmatprep.subr.mxu0 0.0
  %1397 = vmatpush2.msra.mxu0 0.0
  %1398 = vmatprep.subr.mxu0 0.0
  %1399 = vmatpush2.msra.mxu0 0.0
  %1400 = vmatprep.subr.mxu0 0.0
  %1401 = vmatpush2.msra.mxu0 0.0
  %1402 = vmatprep.subr.mxu0 0.0
  %1403 = vmatpush2.msra.mxu0 0.0
  %1404 = vmatprep.subr.mxu0 0.0
  %1405 = vmatpush2.msra.mxu0 0.0
  %1406 = vmatprep.subr.mxu0 0.0
  %1407 = vmatpush2.msra.mxu0 0.0
  %1408 = vmatprep.subr.mxu0 0.0
  %1409 = vmatpush2.msra.mxu0 0.0
  %1410 = vmatprep.subr.mxu0 0.0
  %1411 = vmatpush2.msra.mxu0 0.0
  %1412 = vmatprep.subr.mxu0 0.0
  %1413 = vmatpush2.msra.mxu0 0.0
  %1414 = vmatprep.subr.mxu0 0.0
  %1415 = vmatpush2.msra.mxu0 0.0
  %1416 = vmatprep.subr.mxu0 0.0
  %1417 = vmatpush2.msra.mxu0 0.0
  %1418 = vmatprep.subr.mxu0 0.0
  %1419 = vmatpush2.msra.mxu0 0.0
  %1420 = vmatprep.subr.mxu0 0.0
  %1421 = vmatpush2.msra.mxu0 0.0
  %1422 = vmatprep.subr.mxu0 0.0
  %1423 = vmatpush2.msra.mxu0 0.0
  %1424 = vmatprep.subr.mxu0 0.0
  %1425 = vmatpush2.msra.mxu0 0.0
  %1426 = vmatprep.subr.mxu0 0.0
  %1427 = vmatpush2.msra.mxu0 0.0
  %1428 = vmatprep.mubr.f32.mxu0 0.0
  %1429 = vmatmul.mubr.f32.gmra.mxu0 %v1362
  %v1430 = vpop.f32.mrf.mxu0
  %v1431 = vadd.f32 %v687, %v1430
  %v1432 = vpop.f32.mrf.mxu0
  %1433 = vdwg.mxu0
  %v1434 = vxor.u32 %v1431, 2147483648
  %v1435 = vmul.f32 %v1434, 1.442695
  %v1436 = vpow.pop %v1435
  %v1437 = vadd.f32 %v1436, 1.0
  %v1438 = vrcp.pop %v1437
  %v1439 = vmul.f32 1.0, %v1438
  %v1440 = vtanh.pop %v1431
  %v1441 = vadd.f32 %v1358, %v1440
  %v1442 = vmul.f32 %v1441, %v1439
  %v1443 = vtanh.pop %v1442
  %v1444 = vmul.f32 %v1443, %v1439
  %v1446 = vsel %vm164, %v1444, 0
  %1448 = vmatprep.subr.mxu0 0.0
  %1449 = vmatpush1.msra.mxu0 0.0
  %1450 = vmatprep.subr.mxu0 0.0
  %1451 = vmatpush1.msra.mxu0 0.0
  %1452 = vmatprep.subr.mxu0 0.0
  %1453 = vmatpush1.msra.mxu0 0.0
  %1454 = vmatprep.subr.mxu0 0.0
  %1455 = vmatpush1.msra.mxu0 0.0
  %1456 = vmatprep.subr.mxu0 0.0
  %1457 = vmatpush1.msra.mxu0 0.0
  %1458 = vmatprep.subr.mxu0 0.0
  %1459 = vmatpush1.msra.mxu0 0.0
  %1460 = vmatprep.subr.mxu0 0.0
  %1461 = vmatpush1.msra.mxu0 0.0
  %1462 = vmatprep.subr.mxu0 0.0
  %1463 = vmatpush1.msra.mxu0 0.0
  %1464 = vmatprep.subr.mxu0 0.0
  %1465 = vmatpush1.msra.mxu0 0.0
  %1466 = vmatprep.subr.mxu0 0.0
  %1467 = vmatpush1.msra.mxu0 0.0
  %1468 = vmatprep.subr.mxu0 0.0
  %1469 = vmatpush1.msra.mxu0 0.0
  %1470 = vmatprep.subr.mxu0 0.0
  %1471 = vmatpush1.msra.mxu0 0.0
  %1472 = vmatprep.subr.mxu0 0.0
  %1473 = vmatpush1.msra.mxu0 %v176
  %1474 = vmatprep.subr.mxu0 0.0
  %1475 = vmatpush1.msra.mxu0 %v175
  %1476 = vmatprep.subr.mxu0 0.0
  %1477 = vmatpush1.msra.mxu0 %v174
  %1478 = vmatprep.subr.mxu0 0.0
  %1479 = vmatpush1.msra.mxu0 %v173
  %1480 = vmatprep.subr.mxu0 0.0
  %1481 = vmatpush2.msra.mxu0 0.0
  %1482 = vmatprep.subr.mxu0 0.0
  %1483 = vmatpush2.msra.mxu0 0.0
  %1484 = vmatprep.subr.mxu0 0.0
  %1485 = vmatpush2.msra.mxu0 0.0
  %1486 = vmatprep.subr.mxu0 0.0
  %1487 = vmatpush2.msra.mxu0 0.0
  %1488 = vmatprep.subr.mxu0 0.0
  %1489 = vmatpush2.msra.mxu0 0.0
  %1490 = vmatprep.subr.mxu0 0.0
  %1491 = vmatpush2.msra.mxu0 0.0
  %1492 = vmatprep.subr.mxu0 0.0
  %1493 = vmatpush2.msra.mxu0 0.0
  %1494 = vmatprep.subr.mxu0 0.0
  %1495 = vmatpush2.msra.mxu0 0.0
  %1496 = vmatprep.subr.mxu0 0.0
  %1497 = vmatpush2.msra.mxu0 0.0
  %1498 = vmatprep.subr.mxu0 0.0
  %1499 = vmatpush2.msra.mxu0 0.0
  %1500 = vmatprep.subr.mxu0 0.0
  %1501 = vmatpush2.msra.mxu0 0.0
  %1502 = vmatprep.subr.mxu0 0.0
  %1503 = vmatpush2.msra.mxu0 0.0
  %1504 = vmatprep.subr.mxu0 0.0
  %1505 = vmatpush2.msra.mxu0 0.0
  %1506 = vmatprep.subr.mxu0 0.0
  %1507 = vmatpush2.msra.mxu0 0.0
  %1508 = vmatprep.subr.mxu0 0.0
  %1509 = vmatpush2.msra.mxu0 0.0
  %1510 = vmatprep.subr.mxu0 0.0
  %1511 = vmatpush2.msra.mxu0 0.0
  %1512 = vmatprep.mubr.f32.mxu0 0.0
  %1513 = vmatmul.mubr.f32.gmra.mxu0 %v1446
  %v1514 = vpop.f32.mrf.mxu0
  %v1515 = vadd.f32 %v772, %v1514
  %v1516 = vpop.f32.mrf.mxu0
  %1517 = vdwg.mxu0
  %v1518 = vxor.u32 %v1515, 2147483648
  %v1519 = vmul.f32 %v1518, 1.442695
  %v1520 = vpow.pop %v1519
  %v1521 = vadd.f32 %v1520, 1.0
  %v1522 = vrcp.pop %v1521
  %v1523 = vmul.f32 1.0, %v1522
  %v1524 = vtanh.pop %v1515
  %v1525 = vadd.f32 %v1442, %v1524
  %v1526 = vmul.f32 %v1525, %v1523
  %v1527 = vtanh.pop %v1526
  %v1528 = vmul.f32 %v1527, %v1523
  %1529 = vst.msk [vmem:[%s4] sm:$0xff] %vm164, %v1528
  // Predicated region
  $region18: #{embed_rclstm_forward.1} parent=0 // pred_check
    _
  $region19: #{embed_rclstm_forward.1} parent=0 // pred_check_branch
    %1531 = sbr.rel (0) target = $region21
  $region20: #{embed_rclstm_forward.1} parent=0 // pred_region
    _
  $region21: #{embed_rclstm_forward.1} parent=0 // pred_fallthru
    _
  // Predicated region
  $region22: #{embed_rclstm_forward.1} parent=0 // pred_check
    _
  $region23: #{embed_rclstm_forward.1} parent=0 // pred_check_branch
    %1533 = sbr.rel (0) target = $region25
  $region24: #{embed_rclstm_forward.1} parent=0 // pred_region
    _
  $region25: #{embed_rclstm_forward.1} parent=0 // pred_fallthru
    _

</llo_original>
